<compile_context>
chip_gen: v5e
topology: v5e:2x2
jax: 0.10.0
libtpu: 0.0.40
codegen_flags: <defaults>
</compile_context>

<pallas_src>
import functools

import numpy as np
import jax
import jax.numpy as jnp
from jax.experimental import pallas as pl
from jax.experimental.pallas import tpu as pltpu


class Config:
    vocab_size = 50
    emb_dim = 32
    hidden_dim = 32
    trunc_norm_init_std = 0.1
    pooling = "join"            # exercise the `join` Linear branch
    share_encoder = True
    sample_trick = "attention"  # != 'none' -> salience-score path of sample_graph
    sample_num = 8              # >= max #neighbors -> no _sample_nbr graph surgery


# --------------------------------------------------------------------------
# Kernel 1: fused bidirectional packed-sequence LSTM, single invocation.
# --------------------------------------------------------------------------
def _bilstm_kernel(x_ref, lens_ref,
                   wih_f_ref, whh_f_ref, b_f_ref,
                   wih_b_ref, whh_b_ref, b_b_ref,
                   out_ref, hN_ref, cN_ref,
                   gxf_sc, gxb_sc, outf_sc, outb_sc,
                   *, T, N, H):
    """x_ref: [T*N, E] time-major flattened inputs (row = t*N + n).
    out_ref: [T, N, 2H] time-major outputs (fwd in lanes [0:H), bwd in [H:2H)).
    hN/cN:   [N, 2H] final states (fwd || bwd)."""
    lens = lens_ref[...]                                   # [N, 1] int32

    # Hoisted input projection: one big matmul per direction instead of T tiny ones.
    x_flat = x_ref[...]
    gxf_sc[...] = (jnp.dot(x_flat, wih_f_ref[...],
                           preferred_element_type=jnp.float32) + b_f_ref[...])
    gxb_sc[...] = (jnp.dot(x_flat, wih_b_ref[...],
                           preferred_element_type=jnp.float32) + b_b_ref[...])

    whh_f = whh_f_ref[...]
    whh_b = whh_b_ref[...]

    def cell(gx_t, h, c, whh):
        gates = gx_t + jnp.dot(h, whh, preferred_element_type=jnp.float32)
        i_g = jax.nn.sigmoid(gates[:, 0 * H:1 * H])
        f_g = jax.nn.sigmoid(gates[:, 1 * H:2 * H])
        g_g = jnp.tanh(gates[:, 2 * H:3 * H])
        o_g = jax.nn.sigmoid(gates[:, 3 * H:4 * H])
        c_new = f_g * c + i_g * g_g
        h_new = o_g * jnp.tanh(c_new)
        return h_new, c_new

    zeros = jnp.zeros((N, H), jnp.float32)
    h_f, c_f, h_b, c_b = zeros, zeros, zeros, zeros

    # Statically unrolled recurrence.  Packed-sequence semantics: state frozen
    # and output zero past each row's seq_len (both directions).
    for s in range(T):
        t_f = s
        t_b = T - 1 - s

        hf_new, cf_new = cell(gxf_sc[t_f * N:(t_f + 1) * N, :], h_f, c_f, whh_f)
        vf = (t_f < lens).astype(jnp.float32)              # [N, 1]
        h_f = vf * hf_new + (1.0 - vf) * h_f
        c_f = vf * cf_new + (1.0 - vf) * c_f
        outf_sc[t_f] = vf * hf_new

        hb_new, cb_new = cell(gxb_sc[t_b * N:(t_b + 1) * N, :], h_b, c_b, whh_b)
        vb = (t_b < lens).astype(jnp.float32)
        h_b = vb * hb_new + (1.0 - vb) * h_b
        c_b = vb * cb_new + (1.0 - vb) * c_b
        outb_sc[t_b] = vb * hb_new

    # Final stores only (no per-step hN/cN writes on the critical path).
    out_ref[:, :, 0:H] = outf_sc[...]
    out_ref[:, :, H:2 * H] = outb_sc[...]
    hN_ref[:, 0:H] = h_f
    hN_ref[:, H:2 * H] = h_b
    cN_ref[:, 0:H] = c_f
    cN_ref[:, H:2 * H] = c_b


def bilstm(embedded, lens, p):
    """embedded: [N, T, E]; lens: [N] -> (out_tm [T,N,2H], hN [N,2H], cN [N,2H])."""
    N, T, E = embedded.shape
    H = p["whh_f"].shape[0]
    x_flat = jnp.transpose(embedded, (1, 0, 2)).reshape(T * N, E).astype(jnp.float32)
    lens2 = lens.astype(jnp.int32).reshape(N, 1)
    kernel = functools.partial(_bilstm_kernel, T=T, N=N, H=H)
    out_tm, hN, cN = pl.pallas_call(
        kernel,
        out_shape=(jax.ShapeDtypeStruct((T, N, 2 * H), jnp.float32),
                   jax.ShapeDtypeStruct((N, 2 * H), jnp.float32),
                   jax.ShapeDtypeStruct((N, 2 * H), jnp.float32)),
        scratch_shapes=[pltpu.VMEM((T * N, 4 * H), jnp.float32),   # gates_x fwd
                        pltpu.VMEM((T * N, 4 * H), jnp.float32),   # gates_x bwd
                        pltpu.VMEM((T, N, H), jnp.float32),        # out fwd
                        pltpu.VMEM((T, N, H), jnp.float32)],       # out bwd
    )(x_flat, lens2, p["wih_f"], p["whh_f"], p["b_f"],
      p["wih_b"], p["whh_b"], p["b_b"])
    return out_tm, hN, cN


# --------------------------------------------------------------------------
# Kernel 2: pooling 'join' branch, batched over ALL sequences at once.
#           cat(mean, max) @ W_join == mean @ W[:2H] + max @ W[2H:]  (no concat)
# --------------------------------------------------------------------------
def _pool_join_kernel(x_ref, wm_ref, wx_ref, b_ref, out_ref, *, T):
    x = x_ref[...]                                  # [T, NB, 2H] time-major
    mean_f = jnp.sum(x, axis=0) * (1.0 / T)         # [NB, 2H]
    max_f = jnp.max(x, axis=0)
    out_ref[...] = (jnp.dot(mean_f, wm_ref[...], preferred_element_type=jnp.float32)
                    + jnp.dot(max_f, wx_ref[...], preferred_element_type=jnp.float32)
                    + b_ref[...])


def pooling_all(config, params, h_all, enc_all_tm):
    """h_all: [NB, 2H]; enc_all_tm: [T, NB, 2H] -> pooled node features [NB, 2H]."""
    if config.pooling == "none":
        return h_all
    if config.pooling == "mean":
        return jnp.mean(enc_all_tm, axis=0)
    if config.pooling == "max":
        return jnp.max(enc_all_tm, axis=0)
    T, NB, H2 = enc_all_tm.shape
    w = params["join"]["w"]
    return pl.pallas_call(
        functools.partial(_pool_join_kernel, T=T),
        out_shape=jax.ShapeDtypeStruct((NB, H2), jnp.float32),
    )(enc_all_tm, w[:H2], w[H2:], params["join"]["b"])


# --------------------------------------------------------------------------
# Kernel 3: sample_graph (no-resample branch), one invocation over the whole
#           flattened [B*(1+NBR), 2H] node-feature slab.
# --------------------------------------------------------------------------
def _sample_graph_kernel(feat_ref, src_ref, nn_ref, j_ref, blk_ref,
                         w1s_ref, w1n_ref, b1_ref, w2_ref, b2_ref,
                         w3_ref, b3_ref, out_ref):
    """Row r = b*(1+NBR) + j; j == 0 is the (unscaled) source node of batch b."""
    feats = feat_ref[...]                           # [R, 2H]
    src = src_ref[...]                              # [R, 2H] source row, repeated
    nn = nn_ref[...]                                # [R, 1]  nodes_num, repeated
    j = j_ref[...]                                  # [R, 1]  in-batch node index

    batch_mask = (nn != 1).astype(jnp.float32)      # zero nbr feats if no neighbors
    nbr_clone = feats * batch_mask

    # MLP([4H,2H,2H,1], tanh) with split first layer (no in-kernel concat):
    #   cat([src, nbr]) @ W1 == src @ W1[:2H] + nbr @ W1[2H:]
    h1 = jnp.tanh(jnp.dot(src, w1s_ref[...], preferred_element_type=jnp.float32)
                  + jnp.dot(nbr_clone, w1n_ref[...], preferred_element_type=jnp.float32)
                  + b1_ref[...])
    h2 = jnp.tanh(jnp.dot(h1, w2_ref[...], preferred_element_type=jnp.float32)
                  + b2_ref[...])
    score = (jnp.dot(h2, w3_ref[...], preferred_element_type=jnp.float32)
             + b3_ref[...])                         # [R, 1]

    # softmax over neighbors, * graph_mask, renormalize  ==  masked-exp / sum
    valid = jnp.logical_and(j >= 1, j < nn).astype(jnp.float32)
    m = jnp.max(score, axis=0, keepdims=True)       # global shift cancels per batch
    e = jnp.exp(score - m) * valid                  # [R, 1]
    denom = jnp.dot(blk_ref[...], e, preferred_element_type=jnp.float32)  # per-batch sums
    denom = denom + (denom == 0).astype(jnp.float32)
    dist = e / denom
    scale = dist + (j == 0).astype(jnp.float32)     # source row keeps scale 1
    out_ref[...] = feats * scale


def sample_graph_noresample(node_features, nodes_num, mlp):
    B, Np1, H2 = node_features.shape
    R = B * Np1
    feats_flat = node_features.reshape(R, H2)
    src_flat = jnp.repeat(node_features[:, 0, :], Np1, axis=0)           # [R, 2H]
    nn_flat = jnp.repeat(nodes_num.astype(jnp.int32).reshape(B, 1), Np1, axis=0)
    j_flat = jnp.tile(jnp.arange(Np1, dtype=jnp.int32), B).reshape(R, 1)
    row_b = jnp.arange(R, dtype=jnp.int32) // Np1
    block = (row_b[:, None] == row_b[None, :]).astype(jnp.float32)       # [R, R]
    w1 = mlp["w1"]
    out_flat = pl.pallas_call(
        _sample_graph_kernel,
        out_shape=jax.ShapeDtypeStruct((R, H2), jnp.float32),
    )(feats_flat, src_flat, nn_flat, j_flat, block,
      w1[:H2], w1[H2:], mlp["b1"], mlp["w2"], mlp["b2"], mlp["w3"], mlp["b3"])
    return out_flat.reshape(B, Np1, H2)


# --------------------------------------------------------------------------
# Parameters (deterministic, synthetic) and the full forward pass
# --------------------------------------------------------------------------
def init_params(config, key):
    E, H, V = config.emb_dim, config.hidden_dim, config.vocab_size
    std = config.trunc_norm_init_std
    keys = iter(jax.random.split(key, 32))

    def nrm(shape, scale):
        return (scale * jax.random.normal(next(keys), shape)).astype(jnp.float32)

    def lstm_p():
        # NOTE: single fused bias per direction (== b_ih + b_hh of nn.LSTM summed).
        return dict(
            wih_f=nrm((E, 4 * H), 0.1), whh_f=nrm((H, 4 * H), 0.1), b_f=nrm((1, 4 * H), 0.1),
            wih_b=nrm((E, 4 * H), 0.1), whh_b=nrm((H, 4 * H), 0.1), b_b=nrm((1, 4 * H), 0.1),
        )

    return dict(
        embedding=nrm((V, E), std),
        lstm=lstm_p(),
        graph_lstm=lstm_p(),
        join=dict(w=nrm((4 * H, 2 * H), std), b=nrm((1, 2 * H), std)),
        mlp=dict(w1=nrm((4 * H, 2 * H), std), b1=nrm((1, 2 * H), std),
                 w2=nrm((2 * H, 2 * H), std), b2=nrm((1, 2 * H), std),
                 w3=nrm((2 * H, 1), std), b3=nrm((1, 1), std)),
    )


def encoder_forward(params, config, enc_input, enc_lens, graph_enc_batch,
                    nbr_inputs_len, nodes_num, graphs):
    nodes_num_np = np.asarray(nodes_num)
    B, T = enc_input.shape
    H = config.hidden_dim

    # ---- central sequence: embedding gather (glue) + fused BiLSTM kernel ----
    embedded = params["embedding"][enc_input]                        # [B, T, E]
    enc_out_tm, hN_c, cN_c = bilstm(embedded, enc_lens, params["lstm"])
    encoder_outputs = jnp.transpose(enc_out_tm, (1, 0, 2))           # [B, T, 2H]
    hidden = (jnp.stack([hN_c[:, :H], hN_c[:, H:]], axis=0),         # [2, B, H]
              jnp.stack([cN_c[:, :H], cN_c[:, H:]], axis=0))

    # ---- neighbor sequences: batched into ONE BiLSTM call ----
    # (reference calls graph_feature_lstm in both share_encoder branches)
    neighbor_node_num = int(np.max(nodes_num_np - 1))
    if neighbor_node_num > 0:
        nbr_tokens = graph_enc_batch[:, :neighbor_node_num, :].reshape(
            B * neighbor_node_num, T)
        len_all = nbr_inputs_len[:, :neighbor_node_num].reshape(B * neighbor_node_num)
        len_all = len_all + (len_all == 0).astype(len_all.dtype)     # len += (len==0)
        nbr_embed = params["embedding"][nbr_tokens]                  # [B*NBR, T, E]
        nbr_out_tm, hN_n, _ = bilstm(nbr_embed, len_all, params["graph_lstm"])
        enc_all_tm = jnp.concatenate([enc_out_tm, nbr_out_tm], axis=1)
        h_all = jnp.concatenate([hN_c, hN_n], axis=0)
    else:
        enc_all_tm = enc_out_tm
        h_all = hN_c

    # ---- ONE pooling call over central + all neighbor rows ----
    # TODO(synk): pooling averages over the full zero-padded length T; the
    # reference's custom LSTM wrapper may pad only to max(len) of the sub-batch.
    pooled = pooling_all(config, params, h_all, enc_all_tm)          # [B*(1+NBR), 2H]
    central_feat = pooled[:B][:, None, :]                            # [B, 1, 2H]
    if neighbor_node_num > 0:
        nbr_feat = pooled[B:].reshape(B, neighbor_node_num, 2 * H)
        node_features = jnp.concatenate([central_feat, nbr_feat], axis=1)
    else:
        node_features = central_feat                                 # [B, 1+NBR, 2H]

    if int(np.max(nodes_num_np)) != 1 and config.sample_trick != "none":
        # demo config guarantees max(nodes_num-1) <= sample_num -> no-resample path
        assert neighbor_node_num <= config.sample_num
        node_features_sample = sample_graph_noresample(
            node_features, jnp.asarray(nodes_num), params["mlp"])
        graphs_sample = graphs
        idxs_sample = None
        # TODO(synk): _sample_nbr (top-k + DGL subgraph surgery) not translated;
        # avoided here via config.sample_num >= max neighbors, as in the reference.
    else:
        node_features_sample = node_features
        graphs_sample = graphs
        idxs_sample = None

    node_feature_res = []
    node_feature_idx = [0]
    for i in range(B):
        n = int(nodes_num_np[i])
        node_feature_idx.append(node_feature_idx[-1] + n)
        node_feature_res.append(node_features_sample[i, :n, :])
    node_feature_res = jnp.concatenate(node_feature_res, axis=0)
    assert node_feature_res.shape[0] == int(np.sum(nodes_num_np))

    return (encoder_outputs, hidden, node_feature_res, node_feature_idx,
            graphs_sample, idxs_sample)


if __name__ == "__main__":
    config = Config()
    key = jax.random.PRNGKey(0)
    pkey, ikey = jax.random.split(key)
    params = init_params(config, pkey)

    B, T, MAX_NBR = 2, 8, 3
    k1, k2 = jax.random.split(ikey, 2)
    enc_input = jax.random.randint(k1, (B, T), 0, config.vocab_size, dtype=jnp.int32)
    enc_lens = jnp.array([8, 5], dtype=jnp.int32)
    graph_enc_batch = jax.random.randint(k2, (B, MAX_NBR, T), 0, config.vocab_size,
                                         dtype=jnp.int32)
    nbr_inputs_len = jnp.array([[6, 3, 2], [4, 0, 0]], dtype=jnp.int32)
    nodes_num = jnp.array([4, 2], dtype=jnp.int32)
    graphs = [None] * B   # graph objects unused on the no-resample path

    outs = encoder_forward(params, config, enc_input, enc_lens, graph_enc_batch,
                           nbr_inputs_len, nodes_num, graphs)
    encoder_outputs, hidden, node_feature_res, node_feature_idx, _, _ = outs
    jax.block_until_ready((encoder_outputs, hidden[0], hidden[1], node_feature_res))
    print("KERNEL_OK")
</pallas_src>

<mosaic_0001>
module attributes {stable_mosaic.version = 11 : i64} {
  func.func @_bilstm_kernel(%arg0: memref<16x32xf32, #tpu.memory_space<vmem>>, %arg1: memref<2x1xi32, #tpu.memory_space<vmem>>, %arg2: memref<32x128xf32, #tpu.memory_space<vmem>>, %arg3: memref<32x128xf32, #tpu.memory_space<vmem>>, %arg4: memref<1x128xf32, #tpu.memory_space<vmem>>, %arg5: memref<32x128xf32, #tpu.memory_space<vmem>>, %arg6: memref<32x128xf32, #tpu.memory_space<vmem>>, %arg7: memref<1x128xf32, #tpu.memory_space<vmem>>, %arg8: memref<8x2x64xf32, #tpu.memory_space<vmem>>, %arg9: memref<2x64xf32, #tpu.memory_space<vmem>>, %arg10: memref<2x64xf32, #tpu.memory_space<vmem>>, %arg11: memref<16x128xf32, #tpu.memory_space<vmem>>, %arg12: memref<16x128xf32, #tpu.memory_space<vmem>>, %arg13: memref<8x2x32xf32, #tpu.memory_space<vmem>>, %arg14: memref<8x2x32xf32, #tpu.memory_space<vmem>>) attributes {dimension_semantics = [], scalar_prefetch = 0 : i64, scratch_operands = 4 : i64, tpu.core_type = #tpu.core_type<tc>} {
    %c0 = arith.constant 0 : index
    %c0_0 = arith.constant 0 : index
    %0 = vector.load %arg1[%c0, %c0_0] : memref<2x1xi32, #tpu.memory_space<vmem>>, vector<2x1xi32>
    %c0_1 = arith.constant 0 : index
    %c0_2 = arith.constant 0 : index
    %1 = vector.load %arg0[%c0_1, %c0_2] : memref<16x32xf32, #tpu.memory_space<vmem>>, vector<16x32xf32>
    %c0_3 = arith.constant 0 : index
    %c0_4 = arith.constant 0 : index
    %2 = vector.load %arg2[%c0_3, %c0_4] : memref<32x128xf32, #tpu.memory_space<vmem>>, vector<32x128xf32>
    %cst = arith.constant dense<0.000000e+00> : vector<16x128xf32>
    %3 = tpu.matmul %1, %2, %cst {dimension_numbers = #tpu.dot_dimension_numbers<[1], [0], [0], [1], [0, 0, 1, 1], [], []>} : vector<16x32xf32>, vector<32x128xf32>, vector<16x128xf32> -> vector<16x128xf32>
    %c0_5 = arith.constant 0 : index
    %c0_6 = arith.constant 0 : index
    %4 = vector.load %arg4[%c0_5, %c0_6] : memref<1x128xf32, #tpu.memory_space<vmem>>, vector<1x128xf32>
    %5 = vector.broadcast %4 : vector<1x128xf32> to vector<16x128xf32>
    %6 = arith.addf %3, %5 : vector<16x128xf32>
    %c0_7 = arith.constant 0 : index
    %c0_8 = arith.constant 0 : index
    %7 = vector.load %arg11[%c0_7, %c0_8] : memref<16x128xf32, #tpu.memory_space<vmem>>, vector<16x128xf32>
    tpu.vector_store %arg11[%c0_7, %c0_8], %6 {strides = array<i32>} : memref<16x128xf32, #tpu.memory_space<vmem>>, vector<16x128xf32>,
    %c0_9 = arith.constant 0 : index
    %c0_10 = arith.constant 0 : index
    %8 = vector.load %arg5[%c0_9, %c0_10] : memref<32x128xf32, #tpu.memory_space<vmem>>, vector<32x128xf32>
    %cst_11 = arith.constant dense<0.000000e+00> : vector<16x128xf32>
    %9 = tpu.matmul %1, %8, %cst_11 {dimension_numbers = #tpu.dot_dimension_numbers<[1], [0], [0], [1], [0, 0, 1, 1], [], []>} : vector<16x32xf32>, vector<32x128xf32>, vector<16x128xf32> -> vector<16x128xf32>
    %c0_12 = arith.constant 0 : index
    %c0_13 = arith.constant 0 : index
    %10 = vector.load %arg7[%c0_12, %c0_13] : memref<1x128xf32, #tpu.memory_space<vmem>>, vector<1x128xf32>
    %11 = vector.broadcast %10 : vector<1x128xf32> to vector<16x128xf32>
    %12 = arith.addf %9, %11 : vector<16x128xf32>
    %c0_14 = arith.constant 0 : index
    %c0_15 = arith.constant 0 : index
    %13 = vector.load %arg12[%c0_14, %c0_15] : memref<16x128xf32, #tpu.memory_space<vmem>>, vector<16x128xf32>
    tpu.vector_store %arg12[%c0_14, %c0_15], %12 {strides = array<i32>} : memref<16x128xf32, #tpu.memory_space<vmem>>, vector<16x128xf32>,
    %c0_16 = arith.constant 0 : index
    %c0_17 = arith.constant 0 : index
    %14 = vector.load %arg3[%c0_16, %c0_17] : memref<32x128xf32, #tpu.memory_space<vmem>>, vector<32x128xf32>
    %c0_18 = arith.constant 0 : index
    %c0_19 = arith.constant 0 : index
    %15 = vector.load %arg6[%c0_18, %c0_19] : memref<32x128xf32, #tpu.memory_space<vmem>>, vector<32x128xf32>
    %cst_20 = arith.constant 0.000000e+00 : f32
    %16 = vector.broadcast %cst_20 : f32 to vector<2x32xf32>
    %c0_21 = arith.constant 0 : index
    %c0_22 = arith.constant 0 : index
    %17 = vector.load %arg11[%c0_21, %c0_22] : memref<16x128xf32, #tpu.memory_space<vmem>>, vector<2x128xf32>
    %cst_23 = arith.constant dense<0.000000e+00> : vector<2x128xf32>
    %18 = tpu.matmul %16, %14, %cst_23 {dimension_numbers = #tpu.dot_dimension_numbers<[1], [0], [0], [1], [0, 0, 1, 1], [], []>} : vector<2x32xf32>, vector<32x128xf32>, vector<2x128xf32> -> vector<2x128xf32>
    %19 = arith.addf %17, %18 : vector<2x128xf32>
    %20 = vector.extract_strided_slice %19 {offsets = [0, 0], sizes = [2, 32], strides = [1, 1]} : vector<2x128xf32> to vector<2x32xf32>
    %21 = arith.negf %20 : vector<2x32xf32>
    %22 = math.exp %21 : vector<2x32xf32>
    %cst_24 = arith.constant 1.000000e+00 : f32
    %23 = vector.broadcast %cst_24 : f32 to vector<2x32xf32>
    %24 = arith.addf %23, %22 : vector<2x32xf32>
    %25 = arith.divf %23, %24 : vector<2x32xf32>
    %26 = vector.extract_strided_slice %19 {offsets = [0, 32], sizes = [2, 32], strides = [1, 1]} : vector<2x128xf32> to vector<2x32xf32>
    %27 = arith.negf %26 : vector<2x32xf32>
    %28 = math.exp %27 : vector<2x32xf32>
    %cst_25 = arith.constant 1.000000e+00 : f32
    %29 = vector.broadcast %cst_25 : f32 to vector<2x32xf32>
    %30 = arith.addf %29, %28 : vector<2x32xf32>
    %31 = arith.divf %29, %30 : vector<2x32xf32>
    %32 = vector.extract_strided_slice %19 {offsets = [0, 64], sizes = [2, 32], strides = [1, 1]} : vector<2x128xf32> to vector<2x32xf32>
    %33 = math.tanh %32 : vector<2x32xf32>
    %34 = vector.extract_strided_slice %19 {offsets = [0, 96], sizes = [2, 32], strides = [1, 1]} : vector<2x128xf32> to vector<2x32xf32>
    %35 = arith.negf %34 : vector<2x32xf32>
    %36 = math.exp %35 : vector<2x32xf32>
    %cst_26 = arith.constant 1.000000e+00 : f32
    %37 = vector.broadcast %cst_26 : f32 to vector<2x32xf32>
    %38 = arith.addf %37, %36 : vector<2x32xf32>
    %39 = arith.divf %37, %38 : vector<2x32xf32>
    %40 = arith.mulf %31, %16 : vector<2x32xf32>
    %41 = arith.mulf %25, %33 : vector<2x32xf32>
    %42 = arith.addf %40, %41 : vector<2x32xf32>
    %43 = math.tanh %42 : vector<2x32xf32>
    %44 = arith.mulf %39, %43 : vector<2x32xf32>
    %c0_i32 = arith.constant 0 : i32
    %45 = vector.broadcast %c0_i32 : i32 to vector<2x1xi32>
    %46 = arith.cmpi sgt, %0, %45 : vector<2x1xi32>
    %47 = arith.extui %46 : vector<2x1xi1> to vector<2x1xi32>
    %48 = arith.sitofp %47 : vector<2x1xi32> to vector<2x1xf32>
    %49 = vector.broadcast %48 : vector<2x1xf32> to vector<2x32xf32>
    %50 = arith.mulf %49, %44 : vector<2x32xf32>
    %cst_27 = arith.constant 1.000000e+00 : f32
    %51 = vector.broadcast %cst_27 : f32 to vector<2x1xf32>
    %52 = arith.subf %51, %48 : vector<2x1xf32>
    %53 = vector.broadcast %52 : vector<2x1xf32> to vector<2x32xf32>
    %54 = arith.mulf %53, %16 : vector<2x32xf32>
    %55 = arith.addf %50, %54 : vector<2x32xf32>
    %56 = vector.broadcast %48 : vector<2x1xf32> to vector<2x32xf32>
    %57 = arith.mulf %56, %42 : vector<2x32xf32>
    %cst_28 = arith.constant 1.000000e+00 : f32
    %58 = vector.broadcast %cst_28 : f32 to vector<2x1xf32>
    %59 = arith.subf %58, %48 : vector<2x1xf32>
    %60 = vector.broadcast %59 : vector<2x1xf32> to vector<2x32xf32>
    %61 = arith.mulf %60, %16 : vector<2x32xf32>
    %62 = arith.addf %57, %61 : vector<2x32xf32>
    %63 = vector.broadcast %48 : vector<2x1xf32> to vector<2x32xf32>
    %64 = arith.mulf %63, %44 : vector<2x32xf32>
    %c0_29 = arith.constant 0 : index
    %c0_30 = arith.constant 0 : index
    %c0_31 = arith.constant 0 : index
    %65 = vector.load %arg13[%c0_29, %c0_30, %c0_31] : memref<8x2x32xf32, #tpu.memory_space<vmem>>, vector<1x2x32xf32>
    %66 = vector.shape_cast %65 : vector<1x2x32xf32> to vector<2x32xf32>
    %67 = vector.shape_cast %64 : vector<2x32xf32> to vector<1x2x32xf32>
    tpu.vector_store %arg13[%c0_29, %c0_30, %c0_31], %67 {strides = array<i32>} : memref<8x2x32xf32, #tpu.memory_space<vmem>>, vector<1x2x32xf32>,
    %c14 = arith.constant 14 : index
    %c0_32 = arith.constant 0 : index
    %68 = vector.load %arg12[%c14, %c0_32] : memref<16x128xf32, #tpu.memory_space<vmem>>, vector<2x128xf32>
    %cst_33 = arith.constant dense<0.000000e+00> : vector<2x128xf32>
    %69 = tpu.matmul %16, %15, %cst_33 {dimension_numbers = #tpu.dot_dimension_numbers<[1], [0], [0], [1], [0, 0, 1, 1], [], []>} : vector<2x32xf32>, vector<32x128xf32>, vector<2x128xf32> -> vector<2x128xf32>
    %70 = arith.addf %68, %69 : vector<2x128xf32>
    %71 = vector.extract_strided_slice %70 {offsets = [0, 0], sizes = [2, 32], strides = [1, 1]} : vector<2x128xf32> to vector<2x32xf32>
    %72 = arith.negf %71 : vector<2x32xf32>
    %73 = math.exp %72 : vector<2x32xf32>
    %cst_34 = arith.constant 1.000000e+00 : f32
    %74 = vector.broadcast %cst_34 : f32 to vector<2x32xf32>
    %75 = arith.addf %74, %73 : vector<2x32xf32>
    %76 = arith.divf %74, %75 : vector<2x32xf32>
    %77 = vector.extract_strided_slice %70 {offsets = [0, 32], sizes = [2, 32], strides = [1, 1]} : vector<2x128xf32> to vector<2x32xf32>
    %78 = arith.negf %77 : vector<2x32xf32>
    %79 = math.exp %78 : vector<2x32xf32>
    %cst_35 = arith.constant 1.000000e+00 : f32
    %80 = vector.broadcast %cst_35 : f32 to vector<2x32xf32>
    %81 = arith.addf %80, %79 : vector<2x32xf32>
    %82 = arith.divf %80, %81 : vector<2x32xf32>
    %83 = vector.extract_strided_slice %70 {offsets = [0, 64], sizes = [2, 32], strides = [1, 1]} : vector<2x128xf32> to vector<2x32xf32>
    %84 = math.tanh %83 : vector<2x32xf32>
    %85 = vector.extract_strided_slice %70 {offsets = [0, 96], sizes = [2, 32], strides = [1, 1]} : vector<2x128xf32> to vector<2x32xf32>
    %86 = arith.negf %85 : vector<2x32xf32>
    %87 = math.exp %86 : vector<2x32xf32>
    %cst_36 = arith.constant 1.000000e+00 : f32
    %88 = vector.broadcast %cst_36 : f32 to vector<2x32xf32>
    %89 = arith.addf %88, %87 : vector<2x32xf32>
    %90 = arith.divf %88, %89 : vector<2x32xf32>
    %91 = arith.mulf %82, %16 : vector<2x32xf32>
    %92 = arith.mulf %76, %84 : vector<2x32xf32>
    %93 = arith.addf %91, %92 : vector<2x32xf32>
    %94 = math.tanh %93 : vector<2x32xf32>
    %95 = arith.mulf %90, %94 : vector<2x32xf32>
    %c7_i32 = arith.constant 7 : i32
    %96 = vector.broadcast %c7_i32 : i32 to vector<2x1xi32>
    %97 = arith.cmpi sgt, %0, %96 : vector<2x1xi32>
    %98 = arith.extui %97 : vector<2x1xi1> to vector<2x1xi32>
    %99 = arith.sitofp %98 : vector<2x1xi32> to vector<2x1xf32>
    %100 = vector.broadcast %99 : vector<2x1xf32> to vector<2x32xf32>
    %101 = arith.mulf %100, %95 : vector<2x32xf32>
    %cst_37 = arith.constant 1.000000e+00 : f32
    %102 = vector.broadcast %cst_37 : f32 to vector<2x1xf32>
    %103 = arith.subf %102, %99 : vector<2x1xf32>
    %104 = vector.broadcast %103 : vector<2x1xf32> to vector<2x32xf32>
    %105 = arith.mulf %104, %16 : vector<2x32xf32>
    %106 = arith.addf %101, %105 : vector<2x32xf32>
    %107 = vector.broadcast %99 : vector<2x1xf32> to vector<2x32xf32>
    %108 = arith.mulf %107, %93 : vector<2x32xf32>
    %cst_38 = arith.constant 1.000000e+00 : f32
    %109 = vector.broadcast %cst_38 : f32 to vector<2x1xf32>
    %110 = arith.subf %109, %99 : vector<2x1xf32>
    %111 = vector.broadcast %110 : vector<2x1xf32> to vector<2x32xf32>
    %112 = arith.mulf %111, %16 : vector<2x32xf32>
    %113 = arith.addf %108, %112 : vector<2x32xf32>
    %114 = vector.broadcast %99 : vector<2x1xf32> to vector<2x32xf32>
    %115 = arith.mulf %114, %95 : vector<2x32xf32>
    %c7 = arith.constant 7 : index
    %c0_39 = arith.constant 0 : index
    %c0_40 = arith.constant 0 : index
    %116 = vector.load %arg14[%c7, %c0_39, %c0_40] : memref<8x2x32xf32, #tpu.memory_space<vmem>>, vector<1x2x32xf32>
    %117 = vector.shape_cast %116 : vector<1x2x32xf32> to vector<2x32xf32>
    %118 = vector.shape_cast %115 : vector<2x32xf32> to vector<1x2x32xf32>
    tpu.vector_store %arg14[%c7, %c0_39, %c0_40], %118 {strides = array<i32>} : memref<8x2x32xf32, #tpu.memory_space<vmem>>, vector<1x2x32xf32>,
    %c2 = arith.constant 2 : index
    %c0_41 = arith.constant 0 : index
    %119 = vector.load %arg11[%c2, %c0_41] : memref<16x128xf32, #tpu.memory_space<vmem>>, vector<2x128xf32>
    %cst_42 = arith.constant dense<0.000000e+00> : vector<2x128xf32>
    %120 = tpu.matmul %55, %14, %cst_42 {dimension_numbers = #tpu.dot_dimension_numbers<[1], [0], [0], [1], [0, 0, 1, 1], [], []>} : vector<2x32xf32>, vector<32x128xf32>, vector<2x128xf32> -> vector<2x128xf32>
    %121 = arith.addf %119, %120 : vector<2x128xf32>
    %122 = vector.extract_strided_slice %121 {offsets = [0, 0], sizes = [2, 32], strides = [1, 1]} : vector<2x128xf32> to vector<2x32xf32>
    %123 = arith.negf %122 : vector<2x32xf32>
    %124 = math.exp %123 : vector<2x32xf32>
    %cst_43 = arith.constant 1.000000e+00 : f32
    %125 = vector.broadcast %cst_43 : f32 to vector<2x32xf32>
    %126 = arith.addf %125, %124 : vector<2x32xf32>
    %127 = arith.divf %125, %126 : vector<2x32xf32>
    %128 = vector.extract_strided_slice %121 {offsets = [0, 32], sizes = [2, 32], strides = [1, 1]} : vector<2x128xf32> to vector<2x32xf32>
    %129 = arith.negf %128 : vector<2x32xf32>
    %130 = math.exp %129 : vector<2x32xf32>
    %cst_44 = arith.constant 1.000000e+00 : f32
    %131 = vector.broadcast %cst_44 : f32 to vector<2x32xf32>
    %132 = arith.addf %131, %130 : vector<2x32xf32>
    %133 = arith.divf %131, %132 : vector<2x32xf32>
    %134 = vector.extract_strided_slice %121 {offsets = [0, 64], sizes = [2, 32], strides = [1, 1]} : vector<2x128xf32> to vector<2x32xf32>
    %135 = math.tanh %134 : vector<2x32xf32>
    %136 = vector.extract_strided_slice %121 {offsets = [0, 96], sizes = [2, 32], strides = [1, 1]} : vector<2x128xf32> to vector<2x32xf32>
    %137 = arith.negf %136 : vector<2x32xf32>
    %138 = math.exp %137 : vector<2x32xf32>
    %cst_45 = arith.constant 1.000000e+00 : f32
    %139 = vector.broadcast %cst_45 : f32 to vector<2x32xf32>
    %140 = arith.addf %139, %138 : vector<2x32xf32>
    %141 = arith.divf %139, %140 : vector<2x32xf32>
    %142 = arith.mulf %133, %62 : vector<2x32xf32>
    %143 = arith.mulf %127, %135 : vector<2x32xf32>
    %144 = arith.addf %142, %143 : vector<2x32xf32>
    %145 = math.tanh %144 : vector<2x32xf32>
    %146 = arith.mulf %141, %145 : vector<2x32xf32>
    %c1_i32 = arith.constant 1 : i32
    %147 = vector.broadcast %c1_i32 : i32 to vector<2x1xi32>
    %148 = arith.cmpi sgt, %0, %147 : vector<2x1xi32>
    %149 = arith.extui %148 : vector<2x1xi1> to vector<2x1xi32>
    %150 = arith.sitofp %149 : vector<2x1xi32> to vector<2x1xf32>
    %151 = vector.broadcast %150 : vector<2x1xf32> to vector<2x32xf32>
    %152 = arith.mulf %151, %146 : vector<2x32xf32>
    %cst_46 = arith.constant 1.000000e+00 : f32
    %153 = vector.broadcast %cst_46 : f32 to vector<2x1xf32>
    %154 = arith.subf %153, %150 : vector<2x1xf32>
    %155 = vector.broadcast %154 : vector<2x1xf32> to vector<2x32xf32>
    %156 = arith.mulf %155, %55 : vector<2x32xf32>
    %157 = arith.addf %152, %156 : vector<2x32xf32>
    %158 = vector.broadcast %150 : vector<2x1xf32> to vector<2x32xf32>
    %159 = arith.mulf %158, %144 : vector<2x32xf32>
    %cst_47 = arith.constant 1.000000e+00 : f32
    %160 = vector.broadcast %cst_47 : f32 to vector<2x1xf32>
    %161 = arith.subf %160, %150 : vector<2x1xf32>
    %162 = vector.broadcast %161 : vector<2x1xf32> to vector<2x32xf32>
    %163 = arith.mulf %162, %62 : vector<2x32xf32>
    %164 = arith.addf %159, %163 : vector<2x32xf32>
    %165 = vector.broadcast %150 : vector<2x1xf32> to vector<2x32xf32>
    %166 = arith.mulf %165, %146 : vector<2x32xf32>
    %c1 = arith.constant 1 : index
    %c0_48 = arith.constant 0 : index
    %c0_49 = arith.constant 0 : index
    %167 = vector.load %arg13[%c1, %c0_48, %c0_49] : memref<8x2x32xf32, #tpu.memory_space<vmem>>, vector<1x2x32xf32>
    %168 = vector.shape_cast %167 : vector<1x2x32xf32> to vector<2x32xf32>
    %169 = vector.shape_cast %166 : vector<2x32xf32> to vector<1x2x32xf32>
    tpu.vector_store %arg13[%c1, %c0_48, %c0_49], %169 {strides = array<i32>} : memref<8x2x32xf32, #tpu.memory_space<vmem>>, vector<1x2x32xf32>,
    %c12 = arith.constant 12 : index
    %c0_50 = arith.constant 0 : index
    %170 = vector.load %arg12[%c12, %c0_50] : memref<16x128xf32, #tpu.memory_space<vmem>>, vector<2x128xf32>
    %cst_51 = arith.constant dense<0.000000e+00> : vector<2x128xf32>
    %171 = tpu.matmul %106, %15, %cst_51 {dimension_numbers = #tpu.dot_dimension_numbers<[1], [0], [0], [1], [0, 0, 1, 1], [], []>} : vector<2x32xf32>, vector<32x128xf32>, vector<2x128xf32> -> vector<2x128xf32>
    %172 = arith.addf %170, %171 : vector<2x128xf32>
    %173 = vector.extract_strided_slice %172 {offsets = [0, 0], sizes = [2, 32], strides = [1, 1]} : vector<2x128xf32> to vector<2x32xf32>
    %174 = arith.negf %173 : vector<2x32xf32>
    %175 = math.exp %174 : vector<2x32xf32>
    %cst_52 = arith.constant 1.000000e+00 : f32
    %176 = vector.broadcast %cst_52 : f32 to vector<2x32xf32>
    %177 = arith.addf %176, %175 : vector<2x32xf32>
    %178 = arith.divf %176, %177 : vector<2x32xf32>
    %179 = vector.extract_strided_slice %172 {offsets = [0, 32], sizes = [2, 32], strides = [1, 1]} : vector<2x128xf32> to vector<2x32xf32>
    %180 = arith.negf %179 : vector<2x32xf32>
    %181 = math.exp %180 : vector<2x32xf32>
    %cst_53 = arith.constant 1.000000e+00 : f32
    %182 = vector.broadcast %cst_53 : f32 to vector<2x32xf32>
    %183 = arith.addf %182, %181 : vector<2x32xf32>
    %184 = arith.divf %182, %183 : vector<2x32xf32>
    %185 = vector.extract_strided_slice %172 {offsets = [0, 64], sizes = [2, 32], strides = [1, 1]} : vector<2x128xf32> to vector<2x32xf32>
    %186 = math.tanh %185 : vector<2x32xf32>
    %187 = vector.extract_strided_slice %172 {offsets = [0, 96], sizes = [2, 32], strides = [1, 1]} : vector<2x128xf32> to vector<2x32xf32>
    %188 = arith.negf %187 : vector<2x32xf32>
    %189 = math.exp %188 : vector<2x32xf32>
    %cst_54 = arith.constant 1.000000e+00 : f32
    %190 = vector.broadcast %cst_54 : f32 to vector<2x32xf32>
    %191 = arith.addf %190, %189 : vector<2x32xf32>
    %192 = arith.divf %190, %191 : vector<2x32xf32>
    %193 = arith.mulf %184, %113 : vector<2x32xf32>
    %194 = arith.mulf %178, %186 : vector<2x32xf32>
    %195 = arith.addf %193, %194 : vector<2x32xf32>
    %196 = math.tanh %195 : vector<2x32xf32>
    %197 = arith.mulf %192, %196 : vector<2x32xf32>
    %c6_i32 = arith.constant 6 : i32
    %198 = vector.broadcast %c6_i32 : i32 to vector<2x1xi32>
    %199 = arith.cmpi sgt, %0, %198 : vector<2x1xi32>
    %200 = arith.extui %199 : vector<2x1xi1> to vector<2x1xi32>
    %201 = arith.sitofp %200 : vector<2x1xi32> to vector<2x1xf32>
    %202 = vector.broadcast %201 : vector<2x1xf32> to vector<2x32xf32>
    %203 = arith.mulf %202, %197 : vector<2x32xf32>
    %cst_55 = arith.constant 1.000000e+00 : f32
    %204 = vector.broadcast %cst_55 : f32 to vector<2x1xf32>
    %205 = arith.subf %204, %201 : vector<2x1xf32>
    %206 = vector.broadcast %205 : vector<2x1xf32> to vector<2x32xf32>
    %207 = arith.mulf %206, %106 : vector<2x32xf32>
    %208 = arith.addf %203, %207 : vector<2x32xf32>
    %209 = vector.broadcast %201 : vector<2x1xf32> to vector<2x32xf32>
    %210 = arith.mulf %209, %195 : vector<2x32xf32>
    %cst_56 = arith.constant 1.000000e+00 : f32
    %211 = vector.broadcast %cst_56 : f32 to vector<2x1xf32>
    %212 = arith.subf %211, %201 : vector<2x1xf32>
    %213 = vector.broadcast %212 : vector<2x1xf32> to vector<2x32xf32>
    %214 = arith.mulf %213, %113 : vector<2x32xf32>
    %215 = arith.addf %210, %214 : vector<2x32xf32>
    %216 = vector.broadcast %201 : vector<2x1xf32> to vector<2x32xf32>
    %217 = arith.mulf %216, %197 : vector<2x32xf32>
    %c6 = arith.constant 6 : index
    %c0_57 = arith.constant 0 : index
    %c0_58 = arith.constant 0 : index
    %218 = vector.load %arg14[%c6, %c0_57, %c0_58] : memref<8x2x32xf32, #tpu.memory_space<vmem>>, vector<1x2x32xf32>
    %219 = vector.shape_cast %218 : vector<1x2x32xf32> to vector<2x32xf32>
    %220 = vector.shape_cast %217 : vector<2x32xf32> to vector<1x2x32xf32>
    tpu.vector_store %arg14[%c6, %c0_57, %c0_58], %220 {strides = array<i32>} : memref<8x2x32xf32, #tpu.memory_space<vmem>>, vector<1x2x32xf32>,
    %c4 = arith.constant 4 : index
    %c0_59 = arith.constant 0 : index
    %221 = vector.load %arg11[%c4, %c0_59] : memref<16x128xf32, #tpu.memory_space<vmem>>, vector<2x128xf32>
    %cst_60 = arith.constant dense<0.000000e+00> : vector<2x128xf32>
    %222 = tpu.matmul %157, %14, %cst_60 {dimension_numbers = #tpu.dot_dimension_numbers<[1], [0], [0], [1], [0, 0, 1, 1], [], []>} : vector<2x32xf32>, vector<32x128xf32>, vector<2x128xf32> -> vector<2x128xf32>
    %223 = arith.addf %221, %222 : vector<2x128xf32>
    %224 = vector.extract_strided_slice %223 {offsets = [0, 0], sizes = [2, 32], strides = [1, 1]} : vector<2x128xf32> to vector<2x32xf32>
    %225 = arith.negf %224 : vector<2x32xf32>
    %226 = math.exp %225 : vector<2x32xf32>
    %cst_61 = arith.constant 1.000000e+00 : f32
    %227 = vector.broadcast %cst_61 : f32 to vector<2x32xf32>
    %228 = arith.addf %227, %226 : vector<2x32xf32>
    %229 = arith.divf %227, %228 : vector<2x32xf32>
    %230 = vector.extract_strided_slice %223 {offsets = [0, 32], sizes = [2, 32], strides = [1, 1]} : vector<2x128xf32> to vector<2x32xf32>
    %231 = arith.negf %230 : vector<2x32xf32>
    %232 = math.exp %231 : vector<2x32xf32>
    %cst_62 = arith.constant 1.000000e+00 : f32
    %233 = vector.broadcast %cst_62 : f32 to vector<2x32xf32>
    %234 = arith.addf %233, %232 : vector<2x32xf32>
    %235 = arith.divf %233, %234 : vector<2x32xf32>
    %236 = vector.extract_strided_slice %223 {offsets = [0, 64], sizes = [2, 32], strides = [1, 1]} : vector<2x128xf32> to vector<2x32xf32>
    %237 = math.tanh %236 : vector<2x32xf32>
    %238 = vector.extract_strided_slice %223 {offsets = [0, 96], sizes = [2, 32], strides = [1, 1]} : vector<2x128xf32> to vector<2x32xf32>
    %239 = arith.negf %238 : vector<2x32xf32>
    %240 = math.exp %239 : vector<2x32xf32>
    %cst_63 = arith.constant 1.000000e+00 : f32
    %241 = vector.broadcast %cst_63 : f32 to vector<2x32xf32>
    %242 = arith.addf %241, %240 : vector<2x32xf32>
    %243 = arith.divf %241, %242 : vector<2x32xf32>
    %244 = arith.mulf %235, %164 : vector<2x32xf32>
    %245 = arith.mulf %229, %237 : vector<2x32xf32>
    %246 = arith.addf %244, %245 : vector<2x32xf32>
    %247 = math.tanh %246 : vector<2x32xf32>
    %248 = arith.mulf %243, %247 : vector<2x32xf32>
    %c2_i32 = arith.constant 2 : i32
    %249 = vector.broadcast %c2_i32 : i32 to vector<2x1xi32>
    %250 = arith.cmpi sgt, %0, %249 : vector<2x1xi32>
    %251 = arith.extui %250 : vector<2x1xi1> to vector<2x1xi32>
    %252 = arith.sitofp %251 : vector<2x1xi32> to vector<2x1xf32>
    %253 = vector.broadcast %252 : vector<2x1xf32> to vector<2x32xf32>
    %254 = arith.mulf %253, %248 : vector<2x32xf32>
    %cst_64 = arith.constant 1.000000e+00 : f32
    %255 = vector.broadcast %cst_64 : f32 to vector<2x1xf32>
    %256 = arith.subf %255, %252 : vector<2x1xf32>
    %257 = vector.broadcast %256 : vector<2x1xf32> to vector<2x32xf32>
    %258 = arith.mulf %257, %157 : vector<2x32xf32>
    %259 = arith.addf %254, %258 : vector<2x32xf32>
    %260 = vector.broadcast %252 : vector<2x1xf32> to vector<2x32xf32>
    %261 = arith.mulf %260, %246 : vector<2x32xf32>
    %cst_65 = arith.constant 1.000000e+00 : f32
    %262 = vector.broadcast %cst_65 : f32 to vector<2x1xf32>
    %263 = arith.subf %262, %252 : vector<2x1xf32>
    %264 = vector.broadcast %263 : vector<2x1xf32> to vector<2x32xf32>
    %265 = arith.mulf %264, %164 : vector<2x32xf32>
    %266 = arith.addf %261, %265 : vector<2x32xf32>
    %267 = vector.broadcast %252 : vector<2x1xf32> to vector<2x32xf32>
    %268 = arith.mulf %267, %248 : vector<2x32xf32>
    %c2_66 = arith.constant 2 : index
    %c0_67 = arith.constant 0 : index
    %c0_68 = arith.constant 0 : index
    %269 = vector.load %arg13[%c2_66, %c0_67, %c0_68] : memref<8x2x32xf32, #tpu.memory_space<vmem>>, vector<1x2x32xf32>
    %270 = vector.shape_cast %269 : vector<1x2x32xf32> to vector<2x32xf32>
    %271 = vector.shape_cast %268 : vector<2x32xf32> to vector<1x2x32xf32>
    tpu.vector_store %arg13[%c2_66, %c0_67, %c0_68], %271 {strides = array<i32>} : memref<8x2x32xf32, #tpu.memory_space<vmem>>, vector<1x2x32xf32>,
    %c10 = arith.constant 10 : index
    %c0_69 = arith.constant 0 : index
    %272 = vector.load %arg12[%c10, %c0_69] : memref<16x128xf32, #tpu.memory_space<vmem>>, vector<2x128xf32>
    %cst_70 = arith.constant dense<0.000000e+00> : vector<2x128xf32>
    %273 = tpu.matmul %208, %15, %cst_70 {dimension_numbers = #tpu.dot_dimension_numbers<[1], [0], [0], [1], [0, 0, 1, 1], [], []>} : vector<2x32xf32>, vector<32x128xf32>, vector<2x128xf32> -> vector<2x128xf32>
    %274 = arith.addf %272, %273 : vector<2x128xf32>
    %275 = vector.extract_strided_slice %274 {offsets = [0, 0], sizes = [2, 32], strides = [1, 1]} : vector<2x128xf32> to vector<2x32xf32>
    %276 = arith.negf %275 : vector<2x32xf32>
    %277 = math.exp %276 : vector<2x32xf32>
    %cst_71 = arith.constant 1.000000e+00 : f32
    %278 = vector.broadcast %cst_71 : f32 to vector<2x32xf32>
    %279 = arith.addf %278, %277 : vector<2x32xf32>
    %280 = arith.divf %278, %279 : vector<2x32xf32>
    %281 = vector.extract_strided_slice %274 {offsets = [0, 32], sizes = [2, 32], strides = [1, 1]} : vector<2x128xf32> to vector<2x32xf32>
    %282 = arith.negf %281 : vector<2x32xf32>
    %283 = math.exp %282 : vector<2x32xf32>
    %cst_72 = arith.constant 1.000000e+00 : f32
    %284 = vector.broadcast %cst_72 : f32 to vector<2x32xf32>
    %285 = arith.addf %284, %283 : vector<2x32xf32>
    %286 = arith.divf %284, %285 : vector<2x32xf32>
    %287 = vector.extract_strided_slice %274 {offsets = [0, 64], sizes = [2, 32], strides = [1, 1]} : vector<2x128xf32> to vector<2x32xf32>
    %288 = math.tanh %287 : vector<2x32xf32>
    %289 = vector.extract_strided_slice %274 {offsets = [0, 96], sizes = [2, 32], strides = [1, 1]} : vector<2x128xf32> to vector<2x32xf32>
    %290 = arith.negf %289 : vector<2x32xf32>
    %291 = math.exp %290 : vector<2x32xf32>
    %cst_73 = arith.constant 1.000000e+00 : f32
    %292 = vector.broadcast %cst_73 : f32 to vector<2x32xf32>
    %293 = arith.addf %292, %291 : vector<2x32xf32>
    %294 = arith.divf %292, %293 : vector<2x32xf32>
    %295 = arith.mulf %286, %215 : vector<2x32xf32>
    %296 = arith.mulf %280, %288 : vector<2x32xf32>
    %297 = arith.addf %295, %296 : vector<2x32xf32>
    %298 = math.tanh %297 : vector<2x32xf32>
    %299 = arith.mulf %294, %298 : vector<2x32xf32>
    %c5_i32 = arith.constant 5 : i32
    %300 = vector.broadcast %c5_i32 : i32 to vector<2x1xi32>
    %301 = arith.cmpi sgt, %0, %300 : vector<2x1xi32>
    %302 = arith.extui %301 : vector<2x1xi1> to vector<2x1xi32>
    %303 = arith.sitofp %302 : vector<2x1xi32> to vector<2x1xf32>
    %304 = vector.broadcast %303 : vector<2x1xf32> to vector<2x32xf32>
    %305 = arith.mulf %304, %299 : vector<2x32xf32>
    %cst_74 = arith.constant 1.000000e+00 : f32
    %306 = vector.broadcast %cst_74 : f32 to vector<2x1xf32>
    %307 = arith.subf %306, %303 : vector<2x1xf32>
    %308 = vector.broadcast %307 : vector<2x1xf32> to vector<2x32xf32>
    %309 = arith.mulf %308, %208 : vector<2x32xf32>
    %310 = arith.addf %305, %309 : vector<2x32xf32>
    %311 = vector.broadcast %303 : vector<2x1xf32> to vector<2x32xf32>
    %312 = arith.mulf %311, %297 : vector<2x32xf32>
    %cst_75 = arith.constant 1.000000e+00 : f32
    %313 = vector.broadcast %cst_75 : f32 to vector<2x1xf32>
    %314 = arith.subf %313, %303 : vector<2x1xf32>
    %315 = vector.broadcast %314 : vector<2x1xf32> to vector<2x32xf32>
    %316 = arith.mulf %315, %215 : vector<2x32xf32>
    %317 = arith.addf %312, %316 : vector<2x32xf32>
    %318 = vector.broadcast %303 : vector<2x1xf32> to vector<2x32xf32>
    %319 = arith.mulf %318, %299 : vector<2x32xf32>
    %c5 = arith.constant 5 : index
    %c0_76 = arith.constant 0 : index
    %c0_77 = arith.constant 0 : index
    %320 = vector.load %arg14[%c5, %c0_76, %c0_77] : memref<8x2x32xf32, #tpu.memory_space<vmem>>, vector<1x2x32xf32>
    %321 = vector.shape_cast %320 : vector<1x2x32xf32> to vector<2x32xf32>
    %322 = vector.shape_cast %319 : vector<2x32xf32> to vector<1x2x32xf32>
    tpu.vector_store %arg14[%c5, %c0_76, %c0_77], %322 {strides = array<i32>} : memref<8x2x32xf32, #tpu.memory_space<vmem>>, vector<1x2x32xf32>,
    %c6_78 = arith.constant 6 : index
    %c0_79 = arith.constant 0 : index
    %323 = vector.load %arg11[%c6_78, %c0_79] : memref<16x128xf32, #tpu.memory_space<vmem>>, vector<2x128xf32>
    %cst_80 = arith.constant dense<0.000000e+00> : vector<2x128xf32>
    %324 = tpu.matmul %259, %14, %cst_80 {dimension_numbers = #tpu.dot_dimension_numbers<[1], [0], [0], [1], [0, 0, 1, 1], [], []>} : vector<2x32xf32>, vector<32x128xf32>, vector<2x128xf32> -> vector<2x128xf32>
    %325 = arith.addf %323, %324 : vector<2x128xf32>
    %326 = vector.extract_strided_slice %325 {offsets = [0, 0], sizes = [2, 32], strides = [1, 1]} : vector<2x128xf32> to vector<2x32xf32>
    %327 = arith.negf %326 : vector<2x32xf32>
    %328 = math.exp %327 : vector<2x32xf32>
    %cst_81 = arith.constant 1.000000e+00 : f32
    %329 = vector.broadcast %cst_81 : f32 to vector<2x32xf32>
    %330 = arith.addf %329, %328 : vector<2x32xf32>
    %331 = arith.divf %329, %330 : vector<2x32xf32>
    %332 = vector.extract_strided_slice %325 {offsets = [0, 32], sizes = [2, 32], strides = [1, 1]} : vector<2x128xf32> to vector<2x32xf32>
    %333 = arith.negf %332 : vector<2x32xf32>
    %334 = math.exp %333 : vector<2x32xf32>
    %cst_82 = arith.constant 1.000000e+00 : f32
    %335 = vector.broadcast %cst_82 : f32 to vector<2x32xf32>
    %336 = arith.addf %335, %334 : vector<2x32xf32>
    %337 = arith.divf %335, %336 : vector<2x32xf32>
    %338 = vector.extract_strided_slice %325 {offsets = [0, 64], sizes = [2, 32], strides = [1, 1]} : vector<2x128xf32> to vector<2x32xf32>
    %339 = math.tanh %338 : vector<2x32xf32>
    %340 = vector.extract_strided_slice %325 {offsets = [0, 96], sizes = [2, 32], strides = [1, 1]} : vector<2x128xf32> to vector<2x32xf32>
    %341 = arith.negf %340 : vector<2x32xf32>
    %342 = math.exp %341 : vector<2x32xf32>
    %cst_83 = arith.constant 1.000000e+00 : f32
    %343 = vector.broadcast %cst_83 : f32 to vector<2x32xf32>
    %344 = arith.addf %343, %342 : vector<2x32xf32>
    %345 = arith.divf %343, %344 : vector<2x32xf32>
    %346 = arith.mulf %337, %266 : vector<2x32xf32>
    %347 = arith.mulf %331, %339 : vector<2x32xf32>
    %348 = arith.addf %346, %347 : vector<2x32xf32>
    %349 = math.tanh %348 : vector<2x32xf32>
    %350 = arith.mulf %345, %349 : vector<2x32xf32>
    %c3_i32 = arith.constant 3 : i32
    %351 = vector.broadcast %c3_i32 : i32 to vector<2x1xi32>
    %352 = arith.cmpi sgt, %0, %351 : vector<2x1xi32>
    %353 = arith.extui %352 : vector<2x1xi1> to vector<2x1xi32>
    %354 = arith.sitofp %353 : vector<2x1xi32> to vector<2x1xf32>
    %355 = vector.broadcast %354 : vector<2x1xf32> to vector<2x32xf32>
    %356 = arith.mulf %355, %350 : vector<2x32xf32>
    %cst_84 = arith.constant 1.000000e+00 : f32
    %357 = vector.broadcast %cst_84 : f32 to vector<2x1xf32>
    %358 = arith.subf %357, %354 : vector<2x1xf32>
    %359 = vector.broadcast %358 : vector<2x1xf32> to vector<2x32xf32>
    %360 = arith.mulf %359, %259 : vector<2x32xf32>
    %361 = arith.addf %356, %360 : vector<2x32xf32>
    %362 = vector.broadcast %354 : vector<2x1xf32> to vector<2x32xf32>
    %363 = arith.mulf %362, %348 : vector<2x32xf32>
    %cst_85 = arith.constant 1.000000e+00 : f32
    %364 = vector.broadcast %cst_85 : f32 to vector<2x1xf32>
    %365 = arith.subf %364, %354 : vector<2x1xf32>
    %366 = vector.broadcast %365 : vector<2x1xf32> to vector<2x32xf32>
    %367 = arith.mulf %366, %266 : vector<2x32xf32>
    %368 = arith.addf %363, %367 : vector<2x32xf32>
    %369 = vector.broadcast %354 : vector<2x1xf32> to vector<2x32xf32>
    %370 = arith.mulf %369, %350 : vector<2x32xf32>
    %c3 = arith.constant 3 : index
    %c0_86 = arith.constant 0 : index
    %c0_87 = arith.constant 0 : index
    %371 = vector.load %arg13[%c3, %c0_86, %c0_87] : memref<8x2x32xf32, #tpu.memory_space<vmem>>, vector<1x2x32xf32>
    %372 = vector.shape_cast %371 : vector<1x2x32xf32> to vector<2x32xf32>
    %373 = vector.shape_cast %370 : vector<2x32xf32> to vector<1x2x32xf32>
    tpu.vector_store %arg13[%c3, %c0_86, %c0_87], %373 {strides = array<i32>} : memref<8x2x32xf32, #tpu.memory_space<vmem>>, vector<1x2x32xf32>,
    %c8 = arith.constant 8 : index
    %c0_88 = arith.constant 0 : index
    %374 = vector.load %arg12[%c8, %c0_88] : memref<16x128xf32, #tpu.memory_space<vmem>>, vector<2x128xf32>
    %cst_89 = arith.constant dense<0.000000e+00> : vector<2x128xf32>
    %375 = tpu.matmul %310, %15, %cst_89 {dimension_numbers = #tpu.dot_dimension_numbers<[1], [0], [0], [1], [0, 0, 1, 1], [], []>} : vector<2x32xf32>, vector<32x128xf32>, vector<2x128xf32> -> vector<2x128xf32>
    %376 = arith.addf %374, %375 : vector<2x128xf32>
    %377 = vector.extract_strided_slice %376 {offsets = [0, 0], sizes = [2, 32], strides = [1, 1]} : vector<2x128xf32> to vector<2x32xf32>
    %378 = arith.negf %377 : vector<2x32xf32>
    %379 = math.exp %378 : vector<2x32xf32>
    %cst_90 = arith.constant 1.000000e+00 : f32
    %380 = vector.broadcast %cst_90 : f32 to vector<2x32xf32>
    %381 = arith.addf %380, %379 : vector<2x32xf32>
    %382 = arith.divf %380, %381 : vector<2x32xf32>
    %383 = vector.extract_strided_slice %376 {offsets = [0, 32], sizes = [2, 32], strides = [1, 1]} : vector<2x128xf32> to vector<2x32xf32>
    %384 = arith.negf %383 : vector<2x32xf32>
    %385 = math.exp %384 : vector<2x32xf32>
    %cst_91 = arith.constant 1.000000e+00 : f32
    %386 = vector.broadcast %cst_91 : f32 to vector<2x32xf32>
    %387 = arith.addf %386, %385 : vector<2x32xf32>
    %388 = arith.divf %386, %387 : vector<2x32xf32>
    %389 = vector.extract_strided_slice %376 {offsets = [0, 64], sizes = [2, 32], strides = [1, 1]} : vector<2x128xf32> to vector<2x32xf32>
    %390 = math.tanh %389 : vector<2x32xf32>
    %391 = vector.extract_strided_slice %376 {offsets = [0, 96], sizes = [2, 32], strides = [1, 1]} : vector<2x128xf32> to vector<2x32xf32>
    %392 = arith.negf %391 : vector<2x32xf32>
    %393 = math.exp %392 : vector<2x32xf32>
    %cst_92 = arith.constant 1.000000e+00 : f32
    %394 = vector.broadcast %cst_92 : f32 to vector<2x32xf32>
    %395 = arith.addf %394, %393 : vector<2x32xf32>
    %396 = arith.divf %394, %395 : vector<2x32xf32>
    %397 = arith.mulf %388, %317 : vector<2x32xf32>
    %398 = arith.mulf %382, %390 : vector<2x32xf32>
    %399 = arith.addf %397, %398 : vector<2x32xf32>
    %400 = math.tanh %399 : vector<2x32xf32>
    %401 = arith.mulf %396, %400 : vector<2x32xf32>
    %c4_i32 = arith.constant 4 : i32
    %402 = vector.broadcast %c4_i32 : i32 to vector<2x1xi32>
    %403 = arith.cmpi sgt, %0, %402 : vector<2x1xi32>
    %404 = arith.extui %403 : vector<2x1xi1> to vector<2x1xi32>
    %405 = arith.sitofp %404 : vector<2x1xi32> to vector<2x1xf32>
    %406 = vector.broadcast %405 : vector<2x1xf32> to vector<2x32xf32>
    %407 = arith.mulf %406, %401 : vector<2x32xf32>
    %cst_93 = arith.constant 1.000000e+00 : f32
    %408 = vector.broadcast %cst_93 : f32 to vector<2x1xf32>
    %409 = arith.subf %408, %405 : vector<2x1xf32>
    %410 = vector.broadcast %409 : vector<2x1xf32> to vector<2x32xf32>
    %411 = arith.mulf %410, %310 : vector<2x32xf32>
    %412 = arith.addf %407, %411 : vector<2x32xf32>
    %413 = vector.broadcast %405 : vector<2x1xf32> to vector<2x32xf32>
    %414 = arith.mulf %413, %399 : vector<2x32xf32>
    %cst_94 = arith.constant 1.000000e+00 : f32
    %415 = vector.broadcast %cst_94 : f32 to vector<2x1xf32>
    %416 = arith.subf %415, %405 : vector<2x1xf32>
    %417 = vector.broadcast %416 : vector<2x1xf32> to vector<2x32xf32>
    %418 = arith.mulf %417, %317 : vector<2x32xf32>
    %419 = arith.addf %414, %418 : vector<2x32xf32>
    %420 = vector.broadcast %405 : vector<2x1xf32> to vector<2x32xf32>
    %421 = arith.mulf %420, %401 : vector<2x32xf32>
    %c4_95 = arith.constant 4 : index
    %c0_96 = arith.constant 0 : index
    %c0_97 = arith.constant 0 : index
    %422 = vector.load %arg14[%c4_95, %c0_96, %c0_97] : memref<8x2x32xf32, #tpu.memory_space<vmem>>, vector<1x2x32xf32>
    %423 = vector.shape_cast %422 : vector<1x2x32xf32> to vector<2x32xf32>
    %424 = vector.shape_cast %421 : vector<2x32xf32> to vector<1x2x32xf32>
    tpu.vector_store %arg14[%c4_95, %c0_96, %c0_97], %424 {strides = array<i32>} : memref<8x2x32xf32, #tpu.memory_space<vmem>>, vector<1x2x32xf32>,
    %c8_98 = arith.constant 8 : index
    %c0_99 = arith.constant 0 : index
    %425 = vector.load %arg11[%c8_98, %c0_99] : memref<16x128xf32, #tpu.memory_space<vmem>>, vector<2x128xf32>
    %cst_100 = arith.constant dense<0.000000e+00> : vector<2x128xf32>
    %426 = tpu.matmul %361, %14, %cst_100 {dimension_numbers = #tpu.dot_dimension_numbers<[1], [0], [0], [1], [0, 0, 1, 1], [], []>} : vector<2x32xf32>, vector<32x128xf32>, vector<2x128xf32> -> vector<2x128xf32>
    %427 = arith.addf %425, %426 : vector<2x128xf32>
    %428 = vector.extract_strided_slice %427 {offsets = [0, 0], sizes = [2, 32], strides = [1, 1]} : vector<2x128xf32> to vector<2x32xf32>
    %429 = arith.negf %428 : vector<2x32xf32>
    %430 = math.exp %429 : vector<2x32xf32>
    %cst_101 = arith.constant 1.000000e+00 : f32
    %431 = vector.broadcast %cst_101 : f32 to vector<2x32xf32>
    %432 = arith.addf %431, %430 : vector<2x32xf32>
    %433 = arith.divf %431, %432 : vector<2x32xf32>
    %434 = vector.extract_strided_slice %427 {offsets = [0, 32], sizes = [2, 32], strides = [1, 1]} : vector<2x128xf32> to vector<2x32xf32>
    %435 = arith.negf %434 : vector<2x32xf32>
    %436 = math.exp %435 : vector<2x32xf32>
    %cst_102 = arith.constant 1.000000e+00 : f32
    %437 = vector.broadcast %cst_102 : f32 to vector<2x32xf32>
    %438 = arith.addf %437, %436 : vector<2x32xf32>
    %439 = arith.divf %437, %438 : vector<2x32xf32>
    %440 = vector.extract_strided_slice %427 {offsets = [0, 64], sizes = [2, 32], strides = [1, 1]} : vector<2x128xf32> to vector<2x32xf32>
    %441 = math.tanh %440 : vector<2x32xf32>
    %442 = vector.extract_strided_slice %427 {offsets = [0, 96], sizes = [2, 32], strides = [1, 1]} : vector<2x128xf32> to vector<2x32xf32>
    %443 = arith.negf %442 : vector<2x32xf32>
    %444 = math.exp %443 : vector<2x32xf32>
    %cst_103 = arith.constant 1.000000e+00 : f32
    %445 = vector.broadcast %cst_103 : f32 to vector<2x32xf32>
    %446 = arith.addf %445, %444 : vector<2x32xf32>
    %447 = arith.divf %445, %446 : vector<2x32xf32>
    %448 = arith.mulf %439, %368 : vector<2x32xf32>
    %449 = arith.mulf %433, %441 : vector<2x32xf32>
    %450 = arith.addf %448, %449 : vector<2x32xf32>
    %451 = math.tanh %450 : vector<2x32xf32>
    %452 = arith.mulf %447, %451 : vector<2x32xf32>
    %c4_i32_104 = arith.constant 4 : i32
    %453 = vector.broadcast %c4_i32_104 : i32 to vector<2x1xi32>
    %454 = arith.cmpi sgt, %0, %453 : vector<2x1xi32>
    %455 = arith.extui %454 : vector<2x1xi1> to vector<2x1xi32>
    %456 = arith.sitofp %455 : vector<2x1xi32> to vector<2x1xf32>
    %457 = vector.broadcast %456 : vector<2x1xf32> to vector<2x32xf32>
    %458 = arith.mulf %457, %452 : vector<2x32xf32>
    %cst_105 = arith.constant 1.000000e+00 : f32
    %459 = vector.broadcast %cst_105 : f32 to vector<2x1xf32>
    %460 = arith.subf %459, %456 : vector<2x1xf32>
    %461 = vector.broadcast %460 : vector<2x1xf32> to vector<2x32xf32>
    %462 = arith.mulf %461, %361 : vector<2x32xf32>
    %463 = arith.addf %458, %462 : vector<2x32xf32>
    %464 = vector.broadcast %456 : vector<2x1xf32> to vector<2x32xf32>
    %465 = arith.mulf %464, %450 : vector<2x32xf32>
    %cst_106 = arith.constant 1.000000e+00 : f32
    %466 = vector.broadcast %cst_106 : f32 to vector<2x1xf32>
    %467 = arith.subf %466, %456 : vector<2x1xf32>
    %468 = vector.broadcast %467 : vector<2x1xf32> to vector<2x32xf32>
    %469 = arith.mulf %468, %368 : vector<2x32xf32>
    %470 = arith.addf %465, %469 : vector<2x32xf32>
    %471 = vector.broadcast %456 : vector<2x1xf32> to vector<2x32xf32>
    %472 = arith.mulf %471, %452 : vector<2x32xf32>
    %c4_107 = arith.constant 4 : index
    %c0_108 = arith.constant 0 : index
    %c0_109 = arith.constant 0 : index
    %473 = vector.load %arg13[%c4_107, %c0_108, %c0_109] : memref<8x2x32xf32, #tpu.memory_space<vmem>>, vector<1x2x32xf32>
    %474 = vector.shape_cast %473 : vector<1x2x32xf32> to vector<2x32xf32>
    %475 = vector.shape_cast %472 : vector<2x32xf32> to vector<1x2x32xf32>
    tpu.vector_store %arg13[%c4_107, %c0_108, %c0_109], %475 {strides = array<i32>} : memref<8x2x32xf32, #tpu.memory_space<vmem>>, vector<1x2x32xf32>,
    %c6_110 = arith.constant 6 : index
    %c0_111 = arith.constant 0 : index
    %476 = vector.load %arg12[%c6_110, %c0_111] : memref<16x128xf32, #tpu.memory_space<vmem>>, vector<2x128xf32>
    %cst_112 = arith.constant dense<0.000000e+00> : vector<2x128xf32>
    %477 = tpu.matmul %412, %15, %cst_112 {dimension_numbers = #tpu.dot_dimension_numbers<[1], [0], [0], [1], [0, 0, 1, 1], [], []>} : vector<2x32xf32>, vector<32x128xf32>, vector<2x128xf32> -> vector<2x128xf32>
    %478 = arith.addf %476, %477 : vector<2x128xf32>
    %479 = vector.extract_strided_slice %478 {offsets = [0, 0], sizes = [2, 32], strides = [1, 1]} : vector<2x128xf32> to vector<2x32xf32>
    %480 = arith.negf %479 : vector<2x32xf32>
    %481 = math.exp %480 : vector<2x32xf32>
    %cst_113 = arith.constant 1.000000e+00 : f32
    %482 = vector.broadcast %cst_113 : f32 to vector<2x32xf32>
    %483 = arith.addf %482, %481 : vector<2x32xf32>
    %484 = arith.divf %482, %483 : vector<2x32xf32>
    %485 = vector.extract_strided_slice %478 {offsets = [0, 32], sizes = [2, 32], strides = [1, 1]} : vector<2x128xf32> to vector<2x32xf32>
    %486 = arith.negf %485 : vector<2x32xf32>
    %487 = math.exp %486 : vector<2x32xf32>
    %cst_114 = arith.constant 1.000000e+00 : f32
    %488 = vector.broadcast %cst_114 : f32 to vector<2x32xf32>
    %489 = arith.addf %488, %487 : vector<2x32xf32>
    %490 = arith.divf %488, %489 : vector<2x32xf32>
    %491 = vector.extract_strided_slice %478 {offsets = [0, 64], sizes = [2, 32], strides = [1, 1]} : vector<2x128xf32> to vector<2x32xf32>
    %492 = math.tanh %491 : vector<2x32xf32>
    %493 = vector.extract_strided_slice %478 {offsets = [0, 96], sizes = [2, 32], strides = [1, 1]} : vector<2x128xf32> to vector<2x32xf32>
    %494 = arith.negf %493 : vector<2x32xf32>
    %495 = math.exp %494 : vector<2x32xf32>
    %cst_115 = arith.constant 1.000000e+00 : f32
    %496 = vector.broadcast %cst_115 : f32 to vector<2x32xf32>
    %497 = arith.addf %496, %495 : vector<2x32xf32>
    %498 = arith.divf %496, %497 : vector<2x32xf32>
    %499 = arith.mulf %490, %419 : vector<2x32xf32>
    %500 = arith.mulf %484, %492 : vector<2x32xf32>
    %501 = arith.addf %499, %500 : vector<2x32xf32>
    %502 = math.tanh %501 : vector<2x32xf32>
    %503 = arith.mulf %498, %502 : vector<2x32xf32>
    %c3_i32_116 = arith.constant 3 : i32
    %504 = vector.broadcast %c3_i32_116 : i32 to vector<2x1xi32>
    %505 = arith.cmpi sgt, %0, %504 : vector<2x1xi32>
    %506 = arith.extui %505 : vector<2x1xi1> to vector<2x1xi32>
    %507 = arith.sitofp %506 : vector<2x1xi32> to vector<2x1xf32>
    %508 = vector.broadcast %507 : vector<2x1xf32> to vector<2x32xf32>
    %509 = arith.mulf %508, %503 : vector<2x32xf32>
    %cst_117 = arith.constant 1.000000e+00 : f32
    %510 = vector.broadcast %cst_117 : f32 to vector<2x1xf32>
    %511 = arith.subf %510, %507 : vector<2x1xf32>
    %512 = vector.broadcast %511 : vector<2x1xf32> to vector<2x32xf32>
    %513 = arith.mulf %512, %412 : vector<2x32xf32>
    %514 = arith.addf %509, %513 : vector<2x32xf32>
    %515 = vector.broadcast %507 : vector<2x1xf32> to vector<2x32xf32>
    %516 = arith.mulf %515, %501 : vector<2x32xf32>
    %cst_118 = arith.constant 1.000000e+00 : f32
    %517 = vector.broadcast %cst_118 : f32 to vector<2x1xf32>
    %518 = arith.subf %517, %507 : vector<2x1xf32>
    %519 = vector.broadcast %518 : vector<2x1xf32> to vector<2x32xf32>
    %520 = arith.mulf %519, %419 : vector<2x32xf32>
    %521 = arith.addf %516, %520 : vector<2x32xf32>
    %522 = vector.broadcast %507 : vector<2x1xf32> to vector<2x32xf32>
    %523 = arith.mulf %522, %503 : vector<2x32xf32>
    %c3_119 = arith.constant 3 : index
    %c0_120 = arith.constant 0 : index
    %c0_121 = arith.constant 0 : index
    %524 = vector.load %arg14[%c3_119, %c0_120, %c0_121] : memref<8x2x32xf32, #tpu.memory_space<vmem>>, vector<1x2x32xf32>
    %525 = vector.shape_cast %524 : vector<1x2x32xf32> to vector<2x32xf32>
    %526 = vector.shape_cast %523 : vector<2x32xf32> to vector<1x2x32xf32>
    tpu.vector_store %arg14[%c3_119, %c0_120, %c0_121], %526 {strides = array<i32>} : memref<8x2x32xf32, #tpu.memory_space<vmem>>, vector<1x2x32xf32>,
    %c10_122 = arith.constant 10 : index
    %c0_123 = arith.constant 0 : index
    %527 = vector.load %arg11[%c10_122, %c0_123] : memref<16x128xf32, #tpu.memory_space<vmem>>, vector<2x128xf32>
    %cst_124 = arith.constant dense<0.000000e+00> : vector<2x128xf32>
    %528 = tpu.matmul %463, %14, %cst_124 {dimension_numbers = #tpu.dot_dimension_numbers<[1], [0], [0], [1], [0, 0, 1, 1], [], []>} : vector<2x32xf32>, vector<32x128xf32>, vector<2x128xf32> -> vector<2x128xf32>
    %529 = arith.addf %527, %528 : vector<2x128xf32>
    %530 = vector.extract_strided_slice %529 {offsets = [0, 0], sizes = [2, 32], strides = [1, 1]} : vector<2x128xf32> to vector<2x32xf32>
    %531 = arith.negf %530 : vector<2x32xf32>
    %532 = math.exp %531 : vector<2x32xf32>
    %cst_125 = arith.constant 1.000000e+00 : f32
    %533 = vector.broadcast %cst_125 : f32 to vector<2x32xf32>
    %534 = arith.addf %533, %532 : vector<2x32xf32>
    %535 = arith.divf %533, %534 : vector<2x32xf32>
    %536 = vector.extract_strided_slice %529 {offsets = [0, 32], sizes = [2, 32], strides = [1, 1]} : vector<2x128xf32> to vector<2x32xf32>
    %537 = arith.negf %536 : vector<2x32xf32>
    %538 = math.exp %537 : vector<2x32xf32>
    %cst_126 = arith.constant 1.000000e+00 : f32
    %539 = vector.broadcast %cst_126 : f32 to vector<2x32xf32>
    %540 = arith.addf %539, %538 : vector<2x32xf32>
    %541 = arith.divf %539, %540 : vector<2x32xf32>
    %542 = vector.extract_strided_slice %529 {offsets = [0, 64], sizes = [2, 32], strides = [1, 1]} : vector<2x128xf32> to vector<2x32xf32>
    %543 = math.tanh %542 : vector<2x32xf32>
    %544 = vector.extract_strided_slice %529 {offsets = [0, 96], sizes = [2, 32], strides = [1, 1]} : vector<2x128xf32> to vector<2x32xf32>
    %545 = arith.negf %544 : vector<2x32xf32>
    %546 = math.exp %545 : vector<2x32xf32>
    %cst_127 = arith.constant 1.000000e+00 : f32
    %547 = vector.broadcast %cst_127 : f32 to vector<2x32xf32>
    %548 = arith.addf %547, %546 : vector<2x32xf32>
    %549 = arith.divf %547, %548 : vector<2x32xf32>
    %550 = arith.mulf %541, %470 : vector<2x32xf32>
    %551 = arith.mulf %535, %543 : vector<2x32xf32>
    %552 = arith.addf %550, %551 : vector<2x32xf32>
    %553 = math.tanh %552 : vector<2x32xf32>
    %554 = arith.mulf %549, %553 : vector<2x32xf32>
    %c5_i32_128 = arith.constant 5 : i32
    %555 = vector.broadcast %c5_i32_128 : i32 to vector<2x1xi32>
    %556 = arith.cmpi sgt, %0, %555 : vector<2x1xi32>
    %557 = arith.extui %556 : vector<2x1xi1> to vector<2x1xi32>
    %558 = arith.sitofp %557 : vector<2x1xi32> to vector<2x1xf32>
    %559 = vector.broadcast %558 : vector<2x1xf32> to vector<2x32xf32>
    %560 = arith.mulf %559, %554 : vector<2x32xf32>
    %cst_129 = arith.constant 1.000000e+00 : f32
    %561 = vector.broadcast %cst_129 : f32 to vector<2x1xf32>
    %562 = arith.subf %561, %558 : vector<2x1xf32>
    %563 = vector.broadcast %562 : vector<2x1xf32> to vector<2x32xf32>
    %564 = arith.mulf %563, %463 : vector<2x32xf32>
    %565 = arith.addf %560, %564 : vector<2x32xf32>
    %566 = vector.broadcast %558 : vector<2x1xf32> to vector<2x32xf32>
    %567 = arith.mulf %566, %552 : vector<2x32xf32>
    %cst_130 = arith.constant 1.000000e+00 : f32
    %568 = vector.broadcast %cst_130 : f32 to vector<2x1xf32>
    %569 = arith.subf %568, %558 : vector<2x1xf32>
    %570 = vector.broadcast %569 : vector<2x1xf32> to vector<2x32xf32>
    %571 = arith.mulf %570, %470 : vector<2x32xf32>
    %572 = arith.addf %567, %571 : vector<2x32xf32>
    %573 = vector.broadcast %558 : vector<2x1xf32> to vector<2x32xf32>
    %574 = arith.mulf %573, %554 : vector<2x32xf32>
    %c5_131 = arith.constant 5 : index
    %c0_132 = arith.constant 0 : index
    %c0_133 = arith.constant 0 : index
    %575 = vector.load %arg13[%c5_131, %c0_132, %c0_133] : memref<8x2x32xf32, #tpu.memory_space<vmem>>, vector<1x2x32xf32>
    %576 = vector.shape_cast %575 : vector<1x2x32xf32> to vector<2x32xf32>
    %577 = vector.shape_cast %574 : vector<2x32xf32> to vector<1x2x32xf32>
    tpu.vector_store %arg13[%c5_131, %c0_132, %c0_133], %577 {strides = array<i32>} : memref<8x2x32xf32, #tpu.memory_space<vmem>>, vector<1x2x32xf32>,
    %c4_134 = arith.constant 4 : index
    %c0_135 = arith.constant 0 : index
    %578 = vector.load %arg12[%c4_134, %c0_135] : memref<16x128xf32, #tpu.memory_space<vmem>>, vector<2x128xf32>
    %cst_136 = arith.constant dense<0.000000e+00> : vector<2x128xf32>
    %579 = tpu.matmul %514, %15, %cst_136 {dimension_numbers = #tpu.dot_dimension_numbers<[1], [0], [0], [1], [0, 0, 1, 1], [], []>} : vector<2x32xf32>, vector<32x128xf32>, vector<2x128xf32> -> vector<2x128xf32>
    %580 = arith.addf %578, %579 : vector<2x128xf32>
    %581 = vector.extract_strided_slice %580 {offsets = [0, 0], sizes = [2, 32], strides = [1, 1]} : vector<2x128xf32> to vector<2x32xf32>
    %582 = arith.negf %581 : vector<2x32xf32>
    %583 = math.exp %582 : vector<2x32xf32>
    %cst_137 = arith.constant 1.000000e+00 : f32
    %584 = vector.broadcast %cst_137 : f32 to vector<2x32xf32>
    %585 = arith.addf %584, %583 : vector<2x32xf32>
    %586 = arith.divf %584, %585 : vector<2x32xf32>
    %587 = vector.extract_strided_slice %580 {offsets = [0, 32], sizes = [2, 32], strides = [1, 1]} : vector<2x128xf32> to vector<2x32xf32>
    %588 = arith.negf %587 : vector<2x32xf32>
    %589 = math.exp %588 : vector<2x32xf32>
    %cst_138 = arith.constant 1.000000e+00 : f32
    %590 = vector.broadcast %cst_138 : f32 to vector<2x32xf32>
    %591 = arith.addf %590, %589 : vector<2x32xf32>
    %592 = arith.divf %590, %591 : vector<2x32xf32>
    %593 = vector.extract_strided_slice %580 {offsets = [0, 64], sizes = [2, 32], strides = [1, 1]} : vector<2x128xf32> to vector<2x32xf32>
    %594 = math.tanh %593 : vector<2x32xf32>
    %595 = vector.extract_strided_slice %580 {offsets = [0, 96], sizes = [2, 32], strides = [1, 1]} : vector<2x128xf32> to vector<2x32xf32>
    %596 = arith.negf %595 : vector<2x32xf32>
    %597 = math.exp %596 : vector<2x32xf32>
    %cst_139 = arith.constant 1.000000e+00 : f32
    %598 = vector.broadcast %cst_139 : f32 to vector<2x32xf32>
    %599 = arith.addf %598, %597 : vector<2x32xf32>
    %600 = arith.divf %598, %599 : vector<2x32xf32>
    %601 = arith.mulf %592, %521 : vector<2x32xf32>
    %602 = arith.mulf %586, %594 : vector<2x32xf32>
    %603 = arith.addf %601, %602 : vector<2x32xf32>
    %604 = math.tanh %603 : vector<2x32xf32>
    %605 = arith.mulf %600, %604 : vector<2x32xf32>
    %c2_i32_140 = arith.constant 2 : i32
    %606 = vector.broadcast %c2_i32_140 : i32 to vector<2x1xi32>
    %607 = arith.cmpi sgt, %0, %606 : vector<2x1xi32>
    %608 = arith.extui %607 : vector<2x1xi1> to vector<2x1xi32>
    %609 = arith.sitofp %608 : vector<2x1xi32> to vector<2x1xf32>
    %610 = vector.broadcast %609 : vector<2x1xf32> to vector<2x32xf32>
    %611 = arith.mulf %610, %605 : vector<2x32xf32>
    %cst_141 = arith.constant 1.000000e+00 : f32
    %612 = vector.broadcast %cst_141 : f32 to vector<2x1xf32>
    %613 = arith.subf %612, %609 : vector<2x1xf32>
    %614 = vector.broadcast %613 : vector<2x1xf32> to vector<2x32xf32>
    %615 = arith.mulf %614, %514 : vector<2x32xf32>
    %616 = arith.addf %611, %615 : vector<2x32xf32>
    %617 = vector.broadcast %609 : vector<2x1xf32> to vector<2x32xf32>
    %618 = arith.mulf %617, %603 : vector<2x32xf32>
    %cst_142 = arith.constant 1.000000e+00 : f32
    %619 = vector.broadcast %cst_142 : f32 to vector<2x1xf32>
    %620 = arith.subf %619, %609 : vector<2x1xf32>
    %621 = vector.broadcast %620 : vector<2x1xf32> to vector<2x32xf32>
    %622 = arith.mulf %621, %521 : vector<2x32xf32>
    %623 = arith.addf %618, %622 : vector<2x32xf32>
    %624 = vector.broadcast %609 : vector<2x1xf32> to vector<2x32xf32>
    %625 = arith.mulf %624, %605 : vector<2x32xf32>
    %c2_143 = arith.constant 2 : index
    %c0_144 = arith.constant 0 : index
    %c0_145 = arith.constant 0 : index
    %626 = vector.load %arg14[%c2_143, %c0_144, %c0_145] : memref<8x2x32xf32, #tpu.memory_space<vmem>>, vector<1x2x32xf32>
    %627 = vector.shape_cast %626 : vector<1x2x32xf32> to vector<2x32xf32>
    %628 = vector.shape_cast %625 : vector<2x32xf32> to vector<1x2x32xf32>
    tpu.vector_store %arg14[%c2_143, %c0_144, %c0_145], %628 {strides = array<i32>} : memref<8x2x32xf32, #tpu.memory_space<vmem>>, vector<1x2x32xf32>,
    %c12_146 = arith.constant 12 : index
    %c0_147 = arith.constant 0 : index
    %629 = vector.load %arg11[%c12_146, %c0_147] : memref<16x128xf32, #tpu.memory_space<vmem>>, vector<2x128xf32>
    %cst_148 = arith.constant dense<0.000000e+00> : vector<2x128xf32>
    %630 = tpu.matmul %565, %14, %cst_148 {dimension_numbers = #tpu.dot_dimension_numbers<[1], [0], [0], [1], [0, 0, 1, 1], [], []>} : vector<2x32xf32>, vector<32x128xf32>, vector<2x128xf32> -> vector<2x128xf32>
    %631 = arith.addf %629, %630 : vector<2x128xf32>
    %632 = vector.extract_strided_slice %631 {offsets = [0, 0], sizes = [2, 32], strides = [1, 1]} : vector<2x128xf32> to vector<2x32xf32>
    %633 = arith.negf %632 : vector<2x32xf32>
    %634 = math.exp %633 : vector<2x32xf32>
    %cst_149 = arith.constant 1.000000e+00 : f32
    %635 = vector.broadcast %cst_149 : f32 to vector<2x32xf32>
    %636 = arith.addf %635, %634 : vector<2x32xf32>
    %637 = arith.divf %635, %636 : vector<2x32xf32>
    %638 = vector.extract_strided_slice %631 {offsets = [0, 32], sizes = [2, 32], strides = [1, 1]} : vector<2x128xf32> to vector<2x32xf32>
    %639 = arith.negf %638 : vector<2x32xf32>
    %640 = math.exp %639 : vector<2x32xf32>
    %cst_150 = arith.constant 1.000000e+00 : f32
    %641 = vector.broadcast %cst_150 : f32 to vector<2x32xf32>
    %642 = arith.addf %641, %640 : vector<2x32xf32>
    %643 = arith.divf %641, %642 : vector<2x32xf32>
    %644 = vector.extract_strided_slice %631 {offsets = [0, 64], sizes = [2, 32], strides = [1, 1]} : vector<2x128xf32> to vector<2x32xf32>
    %645 = math.tanh %644 : vector<2x32xf32>
    %646 = vector.extract_strided_slice %631 {offsets = [0, 96], sizes = [2, 32], strides = [1, 1]} : vector<2x128xf32> to vector<2x32xf32>
    %647 = arith.negf %646 : vector<2x32xf32>
    %648 = math.exp %647 : vector<2x32xf32>
    %cst_151 = arith.constant 1.000000e+00 : f32
    %649 = vector.broadcast %cst_151 : f32 to vector<2x32xf32>
    %650 = arith.addf %649, %648 : vector<2x32xf32>
    %651 = arith.divf %649, %650 : vector<2x32xf32>
    %652 = arith.mulf %643, %572 : vector<2x32xf32>
    %653 = arith.mulf %637, %645 : vector<2x32xf32>
    %654 = arith.addf %652, %653 : vector<2x32xf32>
    %655 = math.tanh %654 : vector<2x32xf32>
    %656 = arith.mulf %651, %655 : vector<2x32xf32>
    %c6_i32_152 = arith.constant 6 : i32
    %657 = vector.broadcast %c6_i32_152 : i32 to vector<2x1xi32>
    %658 = arith.cmpi sgt, %0, %657 : vector<2x1xi32>
    %659 = arith.extui %658 : vector<2x1xi1> to vector<2x1xi32>
    %660 = arith.sitofp %659 : vector<2x1xi32> to vector<2x1xf32>
    %661 = vector.broadcast %660 : vector<2x1xf32> to vector<2x32xf32>
    %662 = arith.mulf %661, %656 : vector<2x32xf32>
    %cst_153 = arith.constant 1.000000e+00 : f32
    %663 = vector.broadcast %cst_153 : f32 to vector<2x1xf32>
    %664 = arith.subf %663, %660 : vector<2x1xf32>
    %665 = vector.broadcast %664 : vector<2x1xf32> to vector<2x32xf32>
    %666 = arith.mulf %665, %565 : vector<2x32xf32>
    %667 = arith.addf %662, %666 : vector<2x32xf32>
    %668 = vector.broadcast %660 : vector<2x1xf32> to vector<2x32xf32>
    %669 = arith.mulf %668, %654 : vector<2x32xf32>
    %cst_154 = arith.constant 1.000000e+00 : f32
    %670 = vector.broadcast %cst_154 : f32 to vector<2x1xf32>
    %671 = arith.subf %670, %660 : vector<2x1xf32>
    %672 = vector.broadcast %671 : vector<2x1xf32> to vector<2x32xf32>
    %673 = arith.mulf %672, %572 : vector<2x32xf32>
    %674 = arith.addf %669, %673 : vector<2x32xf32>
    %675 = vector.broadcast %660 : vector<2x1xf32> to vector<2x32xf32>
    %676 = arith.mulf %675, %656 : vector<2x32xf32>
    %c6_155 = arith.constant 6 : index
    %c0_156 = arith.constant 0 : index
    %c0_157 = arith.constant 0 : index
    %677 = vector.load %arg13[%c6_155, %c0_156, %c0_157] : memref<8x2x32xf32, #tpu.memory_space<vmem>>, vector<1x2x32xf32>
    %678 = vector.shape_cast %677 : vector<1x2x32xf32> to vector<2x32xf32>
    %679 = vector.shape_cast %676 : vector<2x32xf32> to vector<1x2x32xf32>
    tpu.vector_store %arg13[%c6_155, %c0_156, %c0_157], %679 {strides = array<i32>} : memref<8x2x32xf32, #tpu.memory_space<vmem>>, vector<1x2x32xf32>,
    %c2_158 = arith.constant 2 : index
    %c0_159 = arith.constant 0 : index
    %680 = vector.load %arg12[%c2_158, %c0_159] : memref<16x128xf32, #tpu.memory_space<vmem>>, vector<2x128xf32>
    %cst_160 = arith.constant dense<0.000000e+00> : vector<2x128xf32>
    %681 = tpu.matmul %616, %15, %cst_160 {dimension_numbers = #tpu.dot_dimension_numbers<[1], [0], [0], [1], [0, 0, 1, 1], [], []>} : vector<2x32xf32>, vector<32x128xf32>, vector<2x128xf32> -> vector<2x128xf32>
    %682 = arith.addf %680, %681 : vector<2x128xf32>
    %683 = vector.extract_strided_slice %682 {offsets = [0, 0], sizes = [2, 32], strides = [1, 1]} : vector<2x128xf32> to vector<2x32xf32>
    %684 = arith.negf %683 : vector<2x32xf32>
    %685 = math.exp %684 : vector<2x32xf32>
    %cst_161 = arith.constant 1.000000e+00 : f32
    %686 = vector.broadcast %cst_161 : f32 to vector<2x32xf32>
    %687 = arith.addf %686, %685 : vector<2x32xf32>
    %688 = arith.divf %686, %687 : vector<2x32xf32>
    %689 = vector.extract_strided_slice %682 {offsets = [0, 32], sizes = [2, 32], strides = [1, 1]} : vector<2x128xf32> to vector<2x32xf32>
    %690 = arith.negf %689 : vector<2x32xf32>
    %691 = math.exp %690 : vector<2x32xf32>
    %cst_162 = arith.constant 1.000000e+00 : f32
    %692 = vector.broadcast %cst_162 : f32 to vector<2x32xf32>
    %693 = arith.addf %692, %691 : vector<2x32xf32>
    %694 = arith.divf %692, %693 : vector<2x32xf32>
    %695 = vector.extract_strided_slice %682 {offsets = [0, 64], sizes = [2, 32], strides = [1, 1]} : vector<2x128xf32> to vector<2x32xf32>
    %696 = math.tanh %695 : vector<2x32xf32>
    %697 = vector.extract_strided_slice %682 {offsets = [0, 96], sizes = [2, 32], strides = [1, 1]} : vector<2x128xf32> to vector<2x32xf32>
    %698 = arith.negf %697 : vector<2x32xf32>
    %699 = math.exp %698 : vector<2x32xf32>
    %cst_163 = arith.constant 1.000000e+00 : f32
    %700 = vector.broadcast %cst_163 : f32 to vector<2x32xf32>
    %701 = arith.addf %700, %699 : vector<2x32xf32>
    %702 = arith.divf %700, %701 : vector<2x32xf32>
    %703 = arith.mulf %694, %623 : vector<2x32xf32>
    %704 = arith.mulf %688, %696 : vector<2x32xf32>
    %705 = arith.addf %703, %704 : vector<2x32xf32>
    %706 = math.tanh %705 : vector<2x32xf32>
    %707 = arith.mulf %702, %706 : vector<2x32xf32>
    %c1_i32_164 = arith.constant 1 : i32
    %708 = vector.broadcast %c1_i32_164 : i32 to vector<2x1xi32>
    %709 = arith.cmpi sgt, %0, %708 : vector<2x1xi32>
    %710 = arith.extui %709 : vector<2x1xi1> to vector<2x1xi32>
    %711 = arith.sitofp %710 : vector<2x1xi32> to vector<2x1xf32>
    %712 = vector.broadcast %711 : vector<2x1xf32> to vector<2x32xf32>
    %713 = arith.mulf %712, %707 : vector<2x32xf32>
    %cst_165 = arith.constant 1.000000e+00 : f32
    %714 = vector.broadcast %cst_165 : f32 to vector<2x1xf32>
    %715 = arith.subf %714, %711 : vector<2x1xf32>
    %716 = vector.broadcast %715 : vector<2x1xf32> to vector<2x32xf32>
    %717 = arith.mulf %716, %616 : vector<2x32xf32>
    %718 = arith.addf %713, %717 : vector<2x32xf32>
    %719 = vector.broadcast %711 : vector<2x1xf32> to vector<2x32xf32>
    %720 = arith.mulf %719, %705 : vector<2x32xf32>
    %cst_166 = arith.constant 1.000000e+00 : f32
    %721 = vector.broadcast %cst_166 : f32 to vector<2x1xf32>
    %722 = arith.subf %721, %711 : vector<2x1xf32>
    %723 = vector.broadcast %722 : vector<2x1xf32> to vector<2x32xf32>
    %724 = arith.mulf %723, %623 : vector<2x32xf32>
    %725 = arith.addf %720, %724 : vector<2x32xf32>
    %726 = vector.broadcast %711 : vector<2x1xf32> to vector<2x32xf32>
    %727 = arith.mulf %726, %707 : vector<2x32xf32>
    %c1_167 = arith.constant 1 : index
    %c0_168 = arith.constant 0 : index
    %c0_169 = arith.constant 0 : index
    %728 = vector.load %arg14[%c1_167, %c0_168, %c0_169] : memref<8x2x32xf32, #tpu.memory_space<vmem>>, vector<1x2x32xf32>
    %729 = vector.shape_cast %728 : vector<1x2x32xf32> to vector<2x32xf32>
    %730 = vector.shape_cast %727 : vector<2x32xf32> to vector<1x2x32xf32>
    tpu.vector_store %arg14[%c1_167, %c0_168, %c0_169], %730 {strides = array<i32>} : memref<8x2x32xf32, #tpu.memory_space<vmem>>, vector<1x2x32xf32>,
    %c14_170 = arith.constant 14 : index
    %c0_171 = arith.constant 0 : index
    %731 = vector.load %arg11[%c14_170, %c0_171] : memref<16x128xf32, #tpu.memory_space<vmem>>, vector<2x128xf32>
    %cst_172 = arith.constant dense<0.000000e+00> : vector<2x128xf32>
    %732 = tpu.matmul %667, %14, %cst_172 {dimension_numbers = #tpu.dot_dimension_numbers<[1], [0], [0], [1], [0, 0, 1, 1], [], []>} : vector<2x32xf32>, vector<32x128xf32>, vector<2x128xf32> -> vector<2x128xf32>
    %733 = arith.addf %731, %732 : vector<2x128xf32>
    %734 = vector.extract_strided_slice %733 {offsets = [0, 0], sizes = [2, 32], strides = [1, 1]} : vector<2x128xf32> to vector<2x32xf32>
    %735 = arith.negf %734 : vector<2x32xf32>
    %736 = math.exp %735 : vector<2x32xf32>
    %cst_173 = arith.constant 1.000000e+00 : f32
    %737 = vector.broadcast %cst_173 : f32 to vector<2x32xf32>
    %738 = arith.addf %737, %736 : vector<2x32xf32>
    %739 = arith.divf %737, %738 : vector<2x32xf32>
    %740 = vector.extract_strided_slice %733 {offsets = [0, 32], sizes = [2, 32], strides = [1, 1]} : vector<2x128xf32> to vector<2x32xf32>
    %741 = arith.negf %740 : vector<2x32xf32>
    %742 = math.exp %741 : vector<2x32xf32>
    %cst_174 = arith.constant 1.000000e+00 : f32
    %743 = vector.broadcast %cst_174 : f32 to vector<2x32xf32>
    %744 = arith.addf %743, %742 : vector<2x32xf32>
    %745 = arith.divf %743, %744 : vector<2x32xf32>
    %746 = vector.extract_strided_slice %733 {offsets = [0, 64], sizes = [2, 32], strides = [1, 1]} : vector<2x128xf32> to vector<2x32xf32>
    %747 = math.tanh %746 : vector<2x32xf32>
    %748 = vector.extract_strided_slice %733 {offsets = [0, 96], sizes = [2, 32], strides = [1, 1]} : vector<2x128xf32> to vector<2x32xf32>
    %749 = arith.negf %748 : vector<2x32xf32>
    %750 = math.exp %749 : vector<2x32xf32>
    %cst_175 = arith.constant 1.000000e+00 : f32
    %751 = vector.broadcast %cst_175 : f32 to vector<2x32xf32>
    %752 = arith.addf %751, %750 : vector<2x32xf32>
    %753 = arith.divf %751, %752 : vector<2x32xf32>
    %754 = arith.mulf %745, %674 : vector<2x32xf32>
    %755 = arith.mulf %739, %747 : vector<2x32xf32>
    %756 = arith.addf %754, %755 : vector<2x32xf32>
    %757 = math.tanh %756 : vector<2x32xf32>
    %758 = arith.mulf %753, %757 : vector<2x32xf32>
    %c7_i32_176 = arith.constant 7 : i32
    %759 = vector.broadcast %c7_i32_176 : i32 to vector<2x1xi32>
    %760 = arith.cmpi sgt, %0, %759 : vector<2x1xi32>
    %761 = arith.extui %760 : vector<2x1xi1> to vector<2x1xi32>
    %762 = arith.sitofp %761 : vector<2x1xi32> to vector<2x1xf32>
    %763 = vector.broadcast %762 : vector<2x1xf32> to vector<2x32xf32>
    %764 = arith.mulf %763, %758 : vector<2x32xf32>
    %cst_177 = arith.constant 1.000000e+00 : f32
    %765 = vector.broadcast %cst_177 : f32 to vector<2x1xf32>
    %766 = arith.subf %765, %762 : vector<2x1xf32>
    %767 = vector.broadcast %766 : vector<2x1xf32> to vector<2x32xf32>
    %768 = arith.mulf %767, %667 : vector<2x32xf32>
    %769 = arith.addf %764, %768 : vector<2x32xf32>
    %770 = vector.broadcast %762 : vector<2x1xf32> to vector<2x32xf32>
    %771 = arith.mulf %770, %756 : vector<2x32xf32>
    %cst_178 = arith.constant 1.000000e+00 : f32
    %772 = vector.broadcast %cst_178 : f32 to vector<2x1xf32>
    %773 = arith.subf %772, %762 : vector<2x1xf32>
    %774 = vector.broadcast %773 : vector<2x1xf32> to vector<2x32xf32>
    %775 = arith.mulf %774, %674 : vector<2x32xf32>
    %776 = arith.addf %771, %775 : vector<2x32xf32>
    %777 = vector.broadcast %762 : vector<2x1xf32> to vector<2x32xf32>
    %778 = arith.mulf %777, %758 : vector<2x32xf32>
    %c7_179 = arith.constant 7 : index
    %c0_180 = arith.constant 0 : index
    %c0_181 = arith.constant 0 : index
    %779 = vector.load %arg13[%c7_179, %c0_180, %c0_181] : memref<8x2x32xf32, #tpu.memory_space<vmem>>, vector<1x2x32xf32>
    %780 = vector.shape_cast %779 : vector<1x2x32xf32> to vector<2x32xf32>
    %781 = vector.shape_cast %778 : vector<2x32xf32> to vector<1x2x32xf32>
    tpu.vector_store %arg13[%c7_179, %c0_180, %c0_181], %781 {strides = array<i32>} : memref<8x2x32xf32, #tpu.memory_space<vmem>>, vector<1x2x32xf32>,
    %c0_182 = arith.constant 0 : index
    %c0_183 = arith.constant 0 : index
    %782 = vector.load %arg12[%c0_182, %c0_183] : memref<16x128xf32, #tpu.memory_space<vmem>>, vector<2x128xf32>
    %cst_184 = arith.constant dense<0.000000e+00> : vector<2x128xf32>
    %783 = tpu.matmul %718, %15, %cst_184 {dimension_numbers = #tpu.dot_dimension_numbers<[1], [0], [0], [1], [0, 0, 1, 1], [], []>} : vector<2x32xf32>, vector<32x128xf32>, vector<2x128xf32> -> vector<2x128xf32>
    %784 = arith.addf %782, %783 : vector<2x128xf32>
    %785 = vector.extract_strided_slice %784 {offsets = [0, 0], sizes = [2, 32], strides = [1, 1]} : vector<2x128xf32> to vector<2x32xf32>
    %786 = arith.negf %785 : vector<2x32xf32>
    %787 = math.exp %786 : vector<2x32xf32>
    %cst_185 = arith.constant 1.000000e+00 : f32
    %788 = vector.broadcast %cst_185 : f32 to vector<2x32xf32>
    %789 = arith.addf %788, %787 : vector<2x32xf32>
    %790 = arith.divf %788, %789 : vector<2x32xf32>
    %791 = vector.extract_strided_slice %784 {offsets = [0, 32], sizes = [2, 32], strides = [1, 1]} : vector<2x128xf32> to vector<2x32xf32>
    %792 = arith.negf %791 : vector<2x32xf32>
    %793 = math.exp %792 : vector<2x32xf32>
    %cst_186 = arith.constant 1.000000e+00 : f32
    %794 = vector.broadcast %cst_186 : f32 to vector<2x32xf32>
    %795 = arith.addf %794, %793 : vector<2x32xf32>
    %796 = arith.divf %794, %795 : vector<2x32xf32>
    %797 = vector.extract_strided_slice %784 {offsets = [0, 64], sizes = [2, 32], strides = [1, 1]} : vector<2x128xf32> to vector<2x32xf32>
    %798 = math.tanh %797 : vector<2x32xf32>
    %799 = vector.extract_strided_slice %784 {offsets = [0, 96], sizes = [2, 32], strides = [1, 1]} : vector<2x128xf32> to vector<2x32xf32>
    %800 = arith.negf %799 : vector<2x32xf32>
    %801 = math.exp %800 : vector<2x32xf32>
    %cst_187 = arith.constant 1.000000e+00 : f32
    %802 = vector.broadcast %cst_187 : f32 to vector<2x32xf32>
    %803 = arith.addf %802, %801 : vector<2x32xf32>
    %804 = arith.divf %802, %803 : vector<2x32xf32>
    %805 = arith.mulf %796, %725 : vector<2x32xf32>
    %806 = arith.mulf %790, %798 : vector<2x32xf32>
    %807 = arith.addf %805, %806 : vector<2x32xf32>
    %808 = math.tanh %807 : vector<2x32xf32>
    %809 = arith.mulf %804, %808 : vector<2x32xf32>
    %c0_i32_188 = arith.constant 0 : i32
    %810 = vector.broadcast %c0_i32_188 : i32 to vector<2x1xi32>
    %811 = arith.cmpi sgt, %0, %810 : vector<2x1xi32>
    %812 = arith.extui %811 : vector<2x1xi1> to vector<2x1xi32>
    %813 = arith.sitofp %812 : vector<2x1xi32> to vector<2x1xf32>
    %814 = vector.broadcast %813 : vector<2x1xf32> to vector<2x32xf32>
    %815 = arith.mulf %814, %809 : vector<2x32xf32>
    %cst_189 = arith.constant 1.000000e+00 : f32
    %816 = vector.broadcast %cst_189 : f32 to vector<2x1xf32>
    %817 = arith.subf %816, %813 : vector<2x1xf32>
    %818 = vector.broadcast %817 : vector<2x1xf32> to vector<2x32xf32>
    %819 = arith.mulf %818, %718 : vector<2x32xf32>
    %820 = arith.addf %815, %819 : vector<2x32xf32>
    %821 = vector.broadcast %813 : vector<2x1xf32> to vector<2x32xf32>
    %822 = arith.mulf %821, %807 : vector<2x32xf32>
    %cst_190 = arith.constant 1.000000e+00 : f32
    %823 = vector.broadcast %cst_190 : f32 to vector<2x1xf32>
    %824 = arith.subf %823, %813 : vector<2x1xf32>
    %825 = vector.broadcast %824 : vector<2x1xf32> to vector<2x32xf32>
    %826 = arith.mulf %825, %725 : vector<2x32xf32>
    %827 = arith.addf %822, %826 : vector<2x32xf32>
    %828 = vector.broadcast %813 : vector<2x1xf32> to vector<2x32xf32>
    %829 = arith.mulf %828, %809 : vector<2x32xf32>
    %c0_191 = arith.constant 0 : index
    %c0_192 = arith.constant 0 : index
    %c0_193 = arith.constant 0 : index
    %830 = vector.load %arg14[%c0_191, %c0_192, %c0_193] : memref<8x2x32xf32, #tpu.memory_space<vmem>>, vector<1x2x32xf32>
    %831 = vector.shape_cast %830 : vector<1x2x32xf32> to vector<2x32xf32>
    %832 = vector.shape_cast %829 : vector<2x32xf32> to vector<1x2x32xf32>
    tpu.vector_store %arg14[%c0_191, %c0_192, %c0_193], %832 {strides = array<i32>} : memref<8x2x32xf32, #tpu.memory_space<vmem>>, vector<1x2x32xf32>,
    %c0_194 = arith.constant 0 : index
    %c0_195 = arith.constant 0 : index
    %c0_196 = arith.constant 0 : index
    %833 = vector.load %arg13[%c0_194, %c0_195, %c0_196] : memref<8x2x32xf32, #tpu.memory_space<vmem>>, vector<8x2x32xf32>
    %c0_197 = arith.constant 0 : index
    %c0_198 = arith.constant 0 : index
    %c0_199 = arith.constant 0 : index
    %834 = vector.load %arg8[%c0_197, %c0_198, %c0_199] : memref<8x2x64xf32, #tpu.memory_space<vmem>>, vector<8x2x32xf32>
    tpu.vector_store %arg8[%c0_197, %c0_198, %c0_199], %833 {strides = array<i32>} : memref<8x2x64xf32, #tpu.memory_space<vmem>>, vector<8x2x32xf32>,
    %c0_200 = arith.constant 0 : index
    %c0_201 = arith.constant 0 : index
    %c0_202 = arith.constant 0 : index
    %835 = vector.load %arg14[%c0_200, %c0_201, %c0_202] : memref<8x2x32xf32, #tpu.memory_space<vmem>>, vector<8x2x32xf32>
    %c0_203 = arith.constant 0 : index
    %c0_204 = arith.constant 0 : index
    %c32 = arith.constant 32 : index
    %836 = vector.load %arg8[%c0_203, %c0_204, %c32] : memref<8x2x64xf32, #tpu.memory_space<vmem>>, vector<8x2x32xf32>
    tpu.vector_store %arg8[%c0_203, %c0_204, %c32], %835 {strides = array<i32>} : memref<8x2x64xf32, #tpu.memory_space<vmem>>, vector<8x2x32xf32>,
    %c0_205 = arith.constant 0 : index
    %c0_206 = arith.constant 0 : index
    %837 = vector.load %arg9[%c0_205, %c0_206] : memref<2x64xf32, #tpu.memory_space<vmem>>, vector<2x32xf32>
    tpu.vector_store %arg9[%c0_205, %c0_206], %769 {strides = array<i32>} : memref<2x64xf32, #tpu.memory_space<vmem>>, vector<2x32xf32>,
    %c0_207 = arith.constant 0 : index
    %c32_208 = arith.constant 32 : index
    %838 = vector.load %arg9[%c0_207, %c32_208] : memref<2x64xf32, #tpu.memory_space<vmem>>, vector<2x32xf32>
    tpu.vector_store %arg9[%c0_207, %c32_208], %820 {strides = array<i32>} : memref<2x64xf32, #tpu.memory_space<vmem>>, vector<2x32xf32>,
    %c0_209 = arith.constant 0 : index
    %c0_210 = arith.constant 0 : index
    %839 = vector.load %arg10[%c0_209, %c0_210] : memref<2x64xf32, #tpu.memory_space<vmem>>, vector<2x32xf32>
    tpu.vector_store %arg10[%c0_209, %c0_210], %776 {strides = array<i32>} : memref<2x64xf32, #tpu.memory_space<vmem>>, vector<2x32xf32>,
    %c0_211 = arith.constant 0 : index
    %c32_212 = arith.constant 32 : index
    %840 = vector.load %arg10[%c0_211, %c32_212] : memref<2x64xf32, #tpu.memory_space<vmem>>, vector<2x32xf32>
    tpu.vector_store %arg10[%c0_211, %c32_212], %827 {strides = array<i32>} : memref<2x64xf32, #tpu.memory_space<vmem>>, vector<2x32xf32>,
    return
  }
}

</mosaic_0001>

<llo_original>
// kernel: tpu_custom_call.1
$region0: #{tpu_custom_call.1}
  #allocation0 [shape = 'u32[]', space=smem, size = 0x4, offset = 0x4, fixed_abs, tag = 'smem constant byte address 0x4 - core index']
  #allocation1 [shape = 'u32[72,128]{1,0:T(1,128)}', space=vmem, size = 0x9000, scoped, tag = 'internal scratch']
  #allocation2 [shape = 'f32[16,128]{1,0:T(8,128)}', space=vmem, size = 0x2000, scoped, tag = 'scratch operand']
  #allocation3 [shape = 'f32[16,128]{1,0:T(8,128)}', space=vmem, size = 0x2000, scoped, tag = 'scratch operand']
  #allocation4 [shape = 'f32[8,2,32]{2,1,0:T(2,128)}', space=vmem, size = 0x2000, scoped, tag = 'scratch operand']
  #allocation5 [shape = 'f32[8,2,32]{2,1,0:T(2,128)}', space=vmem, size = 0x2000, scoped, tag = 'scratch operand']
  %s0 = inlined_call_operand.hbm [shape: f32[16,32], index: 0, kind: input, shape index: {}]
  %s1 = inlined_call_operand.vmem [shape: s32[2,1], index: 1, kind: input, shape index: {}]
  %s2 = inlined_call_operand.hbm [shape: f32[32,128], index: 2, kind: input, shape index: {}]
  %s3 = inlined_call_operand.hbm [shape: f32[32,128], index: 3, kind: input, shape index: {}]
  %s4 = inlined_call_operand.vmem [shape: f32[1,128], index: 4, kind: input, shape index: {}]
  %s5 = inlined_call_operand.hbm [shape: f32[32,128], index: 5, kind: input, shape index: {}]
  %s6 = inlined_call_operand.hbm [shape: f32[32,128], index: 6, kind: input, shape index: {}]
  %s7 = inlined_call_operand.vmem [shape: f32[1,128], index: 7, kind: input, shape index: {}]
  %s8 = inlined_call_operand.hbm [shape: f32[8,2,64], index: 8, kind: output, shape index: {0}]
  %s9 = inlined_call_operand.hbm [shape: f32[2,64], index: 9, kind: output, shape index: {1}]
  %s10 = inlined_call_operand.hbm [shape: f32[2,64], index: 10, kind: output, shape index: {2}]
  %11 = xla_tuple %s8, %s9, %s10
  %s12 = sld [smem:[#allocation0]]
  $region78: #{tpu_custom_call.1} parent=0
    _
  %s14 = ssub.s32 1, %s12
  %s15 = scalar_select 0, %s14, %s12
  $region1: #{tpu_custom_call.1} parent=0
    #allocation6 [shape = 'u8[8192]{0}', space=vmem, size = 0x2000, scoped, tag = 'input window, operand 0, single buffered']
    #allocation7 [shape = 's32[1]{0}', space=sflag, size = 0x4, scoped, tag = 'scoped memory for tpu_custom_call.1']
    #allocation8 [shape = 's32[1]{0}', space=sflag, size = 0x4, scoped, tag = 'scoped memory for tpu_custom_call.1']
    #allocation9 [shape = 'u8[16384]{0}', space=vmem, size = 0x4000, scoped, tag = 'input window, operand 2, single buffered']
    #allocation10 [shape = 's32[1]{0}', space=sflag, size = 0x4, scoped, tag = 'scoped memory for tpu_custom_call.1']
    #allocation11 [shape = 'u8[16384]{0}', space=vmem, size = 0x4000, scoped, tag = 'input window, operand 3, single buffered']
    #allocation12 [shape = 'u8[16384]{0}', space=vmem, size = 0x4000, scoped, tag = 'input window, operand 5, single buffered']
    #allocation13 [shape = 's32[1]{0}', space=sflag, size = 0x4, scoped, tag = 'scoped memory for tpu_custom_call.1']
    #allocation14 [shape = 'u8[16384]{0}', space=vmem, size = 0x4000, scoped, tag = 'input window, operand 6, single buffered']
    #allocation15 [shape = 'u8[8192]{0}', space=vmem, size = 0x2000, scoped, tag = 'output window, operand 0, single buffered']
    #allocation16 [shape = 'u8[1024]{0}', space=vmem, size = 0x400, scoped, tag = 'output window, operand 1, single buffered']
    #allocation17 [shape = 's32[1]{0}', space=sflag, size = 0x4, scoped, tag = 'scoped memory for tpu_custom_call.1']
    #allocation18 [shape = 'u8[1024]{0}', space=vmem, size = 0x400, scoped, tag = 'output window, operand 2, single buffered']
    %16 = vsyncpa [#allocation7], 0
    %17 = vsyncpa [#allocation10], 0
    %18 = vsyncpa [#allocation13], 0
    %19 = vsyncpa [#allocation8], 0
    %20 = vsyncpa [#allocation17], 0
    // Predicated region
    $region2: #{tpu_custom_call.1} parent=1 // pred_check
      _
    $region3: #{tpu_custom_call.1} parent=1 // pred_check_branch
      %22 = sbr.rel (0) target = $region5
    $region4: #{tpu_custom_call.1} parent=1 // pred_region
      %24 = vsyncadd [#allocation7], 0
      %s25 = sshll.u32 %s0, 4
      %s26 = int_to_ptr.hbm [resolvable:$true] %s25
      %s27 = sshll.u32 [#allocation6], 4
      %s28 = int_to_ptr.vmem [resolvable:$true] %s27
      %33 = dma.hbm_to_vmem [thread:$0]  %s26, 256, %s28, [#allocation7], 128, 128, 8
    $region5: #{tpu_custom_call.1} parent=1 // pred_fallthru
      _
    // Predicated region
    $region6: #{tpu_custom_call.1} parent=1 // pred_check
      _
    $region7: #{tpu_custom_call.1} parent=1 // pred_check_branch
      %35 = sbr.rel (0) target = $region9
    $region8: #{tpu_custom_call.1} parent=1 // pred_region
      _
    $region9: #{tpu_custom_call.1} parent=1 // pred_fallthru
      _
    // Predicated region
    $region10: #{tpu_custom_call.1} parent=1 // pred_check
      _
    $region11: #{tpu_custom_call.1} parent=1 // pred_check_branch
      %37 = sbr.rel (0) target = $region13
    $region12: #{tpu_custom_call.1} parent=1 // pred_region
      %39 = vsyncadd [#allocation10], 0
      %s40 = sshll.u32 %s2, 4
      %s41 = int_to_ptr.hbm [resolvable:$true] %s40
      %s42 = sshll.u32 [#allocation9], 4
      %s43 = int_to_ptr.vmem [resolvable:$true] %s42
      %48 = dma.hbm_to_vmem [thread:$0]  %s41, 512, %s43, [#allocation10], 128, 128, 8
    $region13: #{tpu_custom_call.1} parent=1 // pred_fallthru
      _
    // Predicated region
    $region14: #{tpu_custom_call.1} parent=1 // pred_check
      _
    $region15: #{tpu_custom_call.1} parent=1 // pred_check_branch
      %50 = sbr.rel (0) target = $region17
    $region16: #{tpu_custom_call.1} parent=1 // pred_region
      %52 = vsyncadd [#allocation10], 0
      %s53 = sshll.u32 %s3, 4
      %s54 = int_to_ptr.hbm [resolvable:$true] %s53
      %s55 = sshll.u32 [#allocation11], 4
      %s56 = int_to_ptr.vmem [resolvable:$true] %s55
      %61 = dma.hbm_to_vmem [thread:$0]  %s54, 512, %s56, [#allocation10], 128, 128, 8
    $region17: #{tpu_custom_call.1} parent=1 // pred_fallthru
      _
    // Predicated region
    $region18: #{tpu_custom_call.1} parent=1 // pred_check
      _
    $region19: #{tpu_custom_call.1} parent=1 // pred_check_branch
      %63 = sbr.rel (0) target = $region21
    $region20: #{tpu_custom_call.1} parent=1 // pred_region
      _
    $region21: #{tpu_custom_call.1} parent=1 // pred_fallthru
      _
    // Predicated region
    $region22: #{tpu_custom_call.1} parent=1 // pred_check
      _
    $region23: #{tpu_custom_call.1} parent=1 // pred_check_branch
      %65 = sbr.rel (0) target = $region25
    $region24: #{tpu_custom_call.1} parent=1 // pred_region
      %67 = vsyncadd [#allocation13], 0
      %s68 = sshll.u32 %s5, 4
      %s69 = int_to_ptr.hbm [resolvable:$true] %s68
      %s70 = sshll.u32 [#allocation12], 4
      %s71 = int_to_ptr.vmem [resolvable:$true] %s70
      %76 = dma.hbm_to_vmem [thread:$0]  %s69, 512, %s71, [#allocation13], 128, 128, 8
    $region25: #{tpu_custom_call.1} parent=1 // pred_fallthru
      _
    // Predicated region
    $region26: #{tpu_custom_call.1} parent=1 // pred_check
      _
    $region27: #{tpu_custom_call.1} parent=1 // pred_check_branch
      %78 = sbr.rel (0) target = $region29
    $region28: #{tpu_custom_call.1} parent=1 // pred_region
      %80 = vsyncadd [#allocation13], 0
      %s81 = sshll.u32 %s6, 4
      %s82 = int_to_ptr.hbm [resolvable:$true] %s81
      %s83 = sshll.u32 [#allocation14], 4
      %s84 = int_to_ptr.vmem [resolvable:$true] %s83
      %89 = dma.hbm_to_vmem [thread:$0]  %s82, 512, %s84, [#allocation13], 128, 128, 8
    $region29: #{tpu_custom_call.1} parent=1 // pred_fallthru
      _
    // Predicated region
    $region30: #{tpu_custom_call.1} parent=1 // pred_check
      _
    $region31: #{tpu_custom_call.1} parent=1 // pred_check_branch
      %91 = sbr.rel (0) target = $region33
    $region32: #{tpu_custom_call.1} parent=1 // pred_region
      _
    $region33: #{tpu_custom_call.1} parent=1 // pred_fallthru
      _
    // Predicated region
    $region34: #{tpu_custom_call.1} parent=1 // pred_check
      _
    $region35: #{tpu_custom_call.1} parent=1 // pred_check_branch
      %93 = sbr.rel (0) target = $region37
    $region36: #{tpu_custom_call.1} parent=1 // pred_region
      %95 = dma.done [#allocation7], 256
    $region37: #{tpu_custom_call.1} parent=1 // pred_fallthru
      _
    // Predicated region
    $region38: #{tpu_custom_call.1} parent=1 // pred_check
      _
    $region39: #{tpu_custom_call.1} parent=1 // pred_check_branch
      %97 = sbr.rel (0) target = $region41
    $region40: #{tpu_custom_call.1} parent=1 // pred_region
      %99 = dma.done [#allocation10], 512
    $region41: #{tpu_custom_call.1} parent=1 // pred_fallthru
      _
    // Predicated region
    $region42: #{tpu_custom_call.1} parent=1 // pred_check
      _
    $region43: #{tpu_custom_call.1} parent=1 // pred_check_branch
      %101 = sbr.rel (0) target = $region45
    $region44: #{tpu_custom_call.1} parent=1 // pred_region
      %103 = dma.done [#allocation10], 512
    $region45: #{tpu_custom_call.1} parent=1 // pred_fallthru
      _
    // Predicated region
    $region46: #{tpu_custom_call.1} parent=1 // pred_check
      _
    $region47: #{tpu_custom_call.1} parent=1 // pred_check_branch
      %105 = sbr.rel (0) target = $region49
    $region48: #{tpu_custom_call.1} parent=1 // pred_region
      %107 = dma.done [#allocation13], 512
    $region49: #{tpu_custom_call.1} parent=1 // pred_fallthru
      _
    // Predicated region
    $region50: #{tpu_custom_call.1} parent=1 // pred_check
      _
    $region51: #{tpu_custom_call.1} parent=1 // pred_check_branch
      %109 = sbr.rel (0) target = $region53
    $region52: #{tpu_custom_call.1} parent=1 // pred_region
      %111 = dma.done [#allocation13], 512
    $region53: #{tpu_custom_call.1} parent=1 // pred_fallthru
      _
    %v112 = vld [vmem:[%s1] sm:$0x3]
    %v113 = vld [vmem:[#allocation6] sm:$0xff]
    %v114 = vld [vmem:[#allocation6 + $0x8] sm:$0xff]
    %v115 = vld [vmem:[#allocation9] sm:$0xff]
    %v116 = vld [vmem:[#allocation9 + $0x8] sm:$0xff]
    %v117 = vld [vmem:[#allocation9 + $0x10] sm:$0xff]
    %v118 = vld [vmem:[#allocation9 + $0x18] sm:$0xff]
    %v119 = vld [vmem:[%s4] sm:$0x1]
    %v121 = vperm.slane %v119, 0
    %vm123 = vcmask 261120
    %v125 = vsel %vm123, %v113, 0
    %v128 = vsel %vm123, %v114, 0
    %130 = vmatpush.msra.mxu0 0.0
    %131 = vmatpush.msra.mxu0 0.0
    %132 = vmatpush.msra.mxu0 0.0
    %133 = vmatpush.msra.mxu0 0.0
    %134 = vmatpush.msra.mxu0 0.0
    %135 = vmatpush.msra.mxu0 0.0
    %136 = vmatpush.msra.mxu0 0.0
    %137 = vmatpush.msra.mxu0 0.0
    %138 = vmatpush.msra.mxu0 0.0
    %139 = vmatpush.msra.mxu0 0.0
    %140 = vmatpush.msra.mxu0 0.0
    %141 = vmatpush.msra.mxu0 0.0
    %142 = vmatpush.msra.mxu0 %v118
    %143 = vmatpush.msra.mxu0 %v117
    %144 = vmatpush.msra.mxu0 %v116
    %145 = vmatpush.msra.mxu0 %v115
    %146 = vmatmul.f32.gmra.mxu0 %v125
    %v147 = vpop.f32.mrf.mxu0
    %v148 = vadd.f32 %v121, %v147
    %149 = vmatmul.f32.gmra.mxu0 %v128
    %v150 = vpop.f32.mrf.mxu0
    %v151 = vadd.f32 %v121, %v150
    %152 = vdwg.mxu0
    %153 = vst [vmem:[#allocation2] sm:$0xff] %v148
    %154 = vst [vmem:[#allocation2 + $0x8] sm:$0xff] %v151
    %v155 = vld [vmem:[#allocation12] sm:$0xff]
    %v156 = vld [vmem:[#allocation12 + $0x8] sm:$0xff]
    %v157 = vld [vmem:[#allocation12 + $0x10] sm:$0xff]
    %v158 = vld [vmem:[#allocation12 + $0x18] sm:$0xff]
    %v159 = vld [vmem:[%s7] sm:$0x1]
    %v161 = vperm.slane %v159, 0
    %163 = vmatpush.msra.mxu0 0.0
    %164 = vmatpush.msra.mxu0 0.0
    %165 = vmatpush.msra.mxu0 0.0
    %166 = vmatpush.msra.mxu0 0.0
    %167 = vmatpush.msra.mxu0 0.0
    %168 = vmatpush.msra.mxu0 0.0
    %169 = vmatpush.msra.mxu0 0.0
    %170 = vmatpush.msra.mxu0 0.0
    %171 = vmatpush.msra.mxu0 0.0
    %172 = vmatpush.msra.mxu0 0.0
    %173 = vmatpush.msra.mxu0 0.0
    %174 = vmatpush.msra.mxu0 0.0
    %175 = vmatpush.msra.mxu0 %v158
    %176 = vmatpush.msra.mxu0 %v157
    %177 = vmatpush.msra.mxu0 %v156
    %178 = vmatpush.msra.mxu0 %v155
    %179 = vmatmul.f32.gmra.mxu0 %v125
    %v180 = vpop.f32.mrf.mxu0
    %v181 = vadd.f32 %v161, %v180
    %182 = vmatmul.f32.gmra.mxu0 %v128
    %v183 = vpop.f32.mrf.mxu0
    %v184 = vadd.f32 %v161, %v183
    %185 = vdwg.mxu0
    %186 = vst [vmem:[#allocation3] sm:$0xff] %v181
    %187 = vst [vmem:[#allocation3 + $0x8] sm:$0xff] %v184
    %v188 = vld [vmem:[#allocation11] sm:$0xff]
    %v189 = vld [vmem:[#allocation11 + $0x8] sm:$0xff]
    %v190 = vld [vmem:[#allocation11 + $0x10] sm:$0xff]
    %v191 = vld [vmem:[#allocation11 + $0x18] sm:$0xff]
    %v192 = vld [vmem:[#allocation14] sm:$0xff]
    %v193 = vld [vmem:[#allocation14 + $0x8] sm:$0xff]
    %v194 = vld [vmem:[#allocation14 + $0x10] sm:$0xff]
    %v195 = vld [vmem:[#allocation14 + $0x18] sm:$0xff]
    %v196 = vld [vmem:[#allocation2] sm:$0x3]
    %v198 = vsel %vm123, 0.0, 0
    %200 = vmatpush.msra.mxu0 0.0
    %201 = vmatpush.msra.mxu0 0.0
    %202 = vmatpush.msra.mxu0 0.0
    %203 = vmatpush.msra.mxu0 0.0
    %204 = vmatpush.msra.mxu0 0.0
    %205 = vmatpush.msra.mxu0 0.0
    %206 = vmatpush.msra.mxu0 0.0
    %207 = vmatpush.msra.mxu0 0.0
    %208 = vmatpush.msra.mxu0 0.0
    %209 = vmatpush.msra.mxu0 0.0
    %210 = vmatpush.msra.mxu0 0.0
    %211 = vmatpush.msra.mxu0 0.0
    %212 = vmatpush.msra.mxu0 %v191
    %213 = vmatpush.msra.mxu0 %v190
    %214 = vmatpush.msra.mxu0 %v189
    %215 = vmatpush.msra.mxu0 %v188
    %216 = vmatmul.f32.gmra.mxu0 %v198
    %v217 = vpop.f32.mrf.mxu0
    %v218 = vadd.f32 0.0, %v217
    %219 = vdwg.mxu0
    %v220 = vadd.f32 %v196, %v218
    %v221 = vxor.u32 %v220, 2147483648
    %v222 = vmul.f32 %v221, 1.442695
    %v223 = vpow.pop %v222
    %v224 = vadd.f32 %v223, 1.0
    %v225 = vrcp.pop %v224
    %v226 = vmul.f32 %v224, %v225
    %v227 = vsub.f32 1.0, %v226
    %v228 = vmul.f32 %v225, %v227
    %v229 = vadd.f32 %v225, %v228
    %vm230 = vweird.f32 %v224
    %vm231 = vweird.f32 %v225
    %vm232 = vmor %vm230, %vm231
    %v233 = vsel %vm232, %v225, %v229
    %v234 = vand.u32 2147483647, %v224
    %vm235 = vcmp.eq.f32.partialorder %v234, 8.507059e+37
    %v236 = vand.u32 %v224, 2147483648
    %v237 = vor.u32 1.1754944e-38, %v236
    %v238 = vsel %vm235, %v237, %v233
    %v239 = vmul.f32 1.0, %v238
    %v240 = vtanh.pop %v220
    %v241 = vmul.f32 %v239, 0.0
    %243 = vrot.lane.b32.xlu0 %v240, 64
    %v244 = vpop.permute.xlu0 %243
    %v246 = vmul.f32 %v239, %v244
    %248 = vrot.lane.b32.xlu0 %v246, 32
    %v249 = vpop.permute.xlu0 %248
    %v251 = vadd.f32 %v241, %v249
    %v252 = vtanh.pop %v251
    %254 = vrot.lane.b32.xlu0 %v252, 64
    %v255 = vpop.permute.xlu0 %254
    %v257 = vmul.f32 %v239, %v255
    %vm258 = vcmp.gt.s32.totalorder %v112, 0
    %v259 = vsel %vm258, 1, 0
    %v260 = vcvt.s32.f32 %v259
    %262 = vset.pattern.permute.xlu0 0
    %263 = vperm.xlu0 %262, %v260
    %v264 = vpop.permute.xlu0 %263
    %v266 = vmul.f32 %v264, %v257
    %v267 = vsub.f32 1.0, %v260
    %269 = vset.pattern.permute.xlu0 0
    %270 = vperm.xlu0 %269, %v267
    %v271 = vpop.permute.xlu0 %270
    %v273 = vmul.f32 %v271, 0.0
    %v274 = vadd.f32 %v266, %v273
    %v275 = vmul.f32 %v264, %v251
    %v276 = vadd.f32 %v275, %v273
    %278 = vrot.lane.b32.xlu0 %v266, 32
    %v279 = vpop.permute.xlu0 %278
    %vm281 = vcmask 254976
    %282 = vst.msk [vmem:[#allocation4] sm:$0x3] %vm281, %v279
    %v283 = vld [vmem:[#allocation3 + $0xe] sm:$0x3]
    %284 = vmatpush.msra.mxu0 0.0
    %285 = vmatpush.msra.mxu0 0.0
    %286 = vmatpush.msra.mxu0 0.0
    %287 = vmatpush.msra.mxu0 0.0
    %288 = vmatpush.msra.mxu0 0.0
    %289 = vmatpush.msra.mxu0 0.0
    %290 = vmatpush.msra.mxu0 0.0
    %291 = vmatpush.msra.mxu0 0.0
    %292 = vmatpush.msra.mxu0 0.0
    %293 = vmatpush.msra.mxu0 0.0
    %294 = vmatpush.msra.mxu0 0.0
    %295 = vmatpush.msra.mxu0 0.0
    %296 = vmatpush.msra.mxu0 %v195
    %297 = vmatpush.msra.mxu0 %v194
    %298 = vmatpush.msra.mxu0 %v193
    %299 = vmatpush.msra.mxu0 %v192
    %300 = vmatmul.f32.gmra.mxu0 %v198
    %v301 = vpop.f32.mrf.mxu0
    %v302 = vadd.f32 0.0, %v301
    %303 = vdwg.mxu0
    %v304 = vadd.f32 %v283, %v302
    %v305 = vxor.u32 %v304, 2147483648
    %v306 = vmul.f32 %v305, 1.442695
    %v307 = vpow.pop %v306
    %v308 = vadd.f32 %v307, 1.0
    %v309 = vrcp.pop %v308
    %v310 = vmul.f32 %v308, %v309
    %v311 = vsub.f32 1.0, %v310
    %v312 = vmul.f32 %v309, %v311
    %v313 = vadd.f32 %v309, %v312
    %vm314 = vweird.f32 %v308
    %vm315 = vweird.f32 %v309
    %vm316 = vmor %vm314, %vm315
    %v317 = vsel %vm316, %v309, %v313
    %v318 = vand.u32 2147483647, %v308
    %vm319 = vcmp.eq.f32.partialorder %v318, 8.507059e+37
    %v320 = vand.u32 %v308, 2147483648
    %v321 = vor.u32 1.1754944e-38, %v320
    %v322 = vsel %vm319, %v321, %v317
    %v323 = vmul.f32 1.0, %v322
    %v324 = vtanh.pop %v304
    %v325 = vmul.f32 %v323, 0.0
    %327 = vrot.lane.b32.xlu0 %v324, 64
    %v328 = vpop.permute.xlu0 %327
    %v330 = vmul.f32 %v323, %v328
    %332 = vrot.lane.b32.xlu0 %v330, 32
    %v333 = vpop.permute.xlu0 %332
    %v335 = vadd.f32 %v325, %v333
    %v336 = vtanh.pop %v335
    %338 = vrot.lane.b32.xlu0 %v336, 64
    %v339 = vpop.permute.xlu0 %338
    %v341 = vmul.f32 %v323, %v339
    %vm342 = vcmp.gt.s32.totalorder %v112, 7
    %v343 = vsel %vm342, 1, 0
    %v344 = vcvt.s32.f32 %v343
    %346 = vset.pattern.permute.xlu0 0
    %347 = vperm.xlu0 %346, %v344
    %v348 = vpop.permute.xlu0 %347
    %v350 = vmul.f32 %v348, %v341
    %v351 = vsub.f32 1.0, %v344
    %353 = vset.pattern.permute.xlu0 0
    %354 = vperm.xlu0 %353, %v351
    %v355 = vpop.permute.xlu0 %354
    %v357 = vmul.f32 %v355, 0.0
    %v358 = vadd.f32 %v350, %v357
    %v359 = vmul.f32 %v348, %v335
    %v360 = vadd.f32 %v359, %v357
    %362 = vrot.lane.b32.xlu0 %v350, 32
    %v363 = vpop.permute.xlu0 %362
    %s365 = scalar_lea.vmem [#allocation5], 14
    %366 = vst.msk [vmem:[%s365] sm:$0x3] %vm281, %v363
    %v367 = vld [vmem:[#allocation2 + $0x2] sm:$0x3]
    %369 = vrot.lane.b32.xlu0 %v274, 32
    %v370 = vpop.permute.xlu0 %369
    %v371 = vsel %vm123, %v370, 0
    %373 = vmatpush.msra.mxu0 0.0
    %374 = vmatpush.msra.mxu0 0.0
    %375 = vmatpush.msra.mxu0 0.0
    %376 = vmatpush.msra.mxu0 0.0
    %377 = vmatpush.msra.mxu0 0.0
    %378 = vmatpush.msra.mxu0 0.0
    %379 = vmatpush.msra.mxu0 0.0
    %380 = vmatpush.msra.mxu0 0.0
    %381 = vmatpush.msra.mxu0 0.0
    %382 = vmatpush.msra.mxu0 0.0
    %383 = vmatpush.msra.mxu0 0.0
    %384 = vmatpush.msra.mxu0 0.0
    %385 = vmatpush.msra.mxu0 %v191
    %386 = vmatpush.msra.mxu0 %v190
    %387 = vmatpush.msra.mxu0 %v189
    %388 = vmatpush.msra.mxu0 %v188
    %389 = vmatmul.f32.gmra.mxu0 %v371
    %v390 = vpop.f32.mrf.mxu0
    %v391 = vadd.f32 0.0, %v390
    %392 = vdwg.mxu0
    %v393 = vadd.f32 %v367, %v391
    %v394 = vxor.u32 %v393, 2147483648
    %v395 = vmul.f32 %v394, 1.442695
    %v396 = vpow.pop %v395
    %v397 = vadd.f32 %v396, 1.0
    %v398 = vrcp.pop %v397
    %v399 = vmul.f32 %v397, %v398
    %v400 = vsub.f32 1.0, %v399
    %v401 = vmul.f32 %v398, %v400
    %v402 = vadd.f32 %v398, %v401
    %vm403 = vweird.f32 %v397
    %vm404 = vweird.f32 %v398
    %vm405 = vmor %vm403, %vm404
    %v406 = vsel %vm405, %v398, %v402
    %v407 = vand.u32 2147483647, %v397
    %vm408 = vcmp.eq.f32.partialorder %v407, 8.507059e+37
    %v409 = vand.u32 %v397, 2147483648
    %v410 = vor.u32 1.1754944e-38, %v409
    %v411 = vsel %vm408, %v410, %v406
    %v412 = vmul.f32 1.0, %v411
    %v413 = vtanh.pop %v393
    %v414 = vmul.f32 %v412, %v276
    %416 = vrot.lane.b32.xlu0 %v413, 64
    %v417 = vpop.permute.xlu0 %416
    %v419 = vmul.f32 %v412, %v417
    %421 = vrot.lane.b32.xlu0 %v419, 32
    %v422 = vpop.permute.xlu0 %421
    %v424 = vadd.f32 %v414, %v422
    %v425 = vtanh.pop %v424
    %427 = vrot.lane.b32.xlu0 %v425, 64
    %v428 = vpop.permute.xlu0 %427
    %v430 = vmul.f32 %v412, %v428
    %vm431 = vcmp.gt.s32.totalorder %v112, 1
    %v432 = vsel %vm431, 1, 0
    %v433 = vcvt.s32.f32 %v432
    %435 = vset.pattern.permute.xlu0 0
    %436 = vperm.xlu0 %435, %v433
    %v437 = vpop.permute.xlu0 %436
    %v439 = vmul.f32 %v437, %v430
    %v440 = vsub.f32 1.0, %v433
    %442 = vset.pattern.permute.xlu0 0
    %443 = vperm.xlu0 %442, %v440
    %v444 = vpop.permute.xlu0 %443
    %v446 = vmul.f32 %v444, %v274
    %v447 = vadd.f32 %v439, %v446
    %v448 = vmul.f32 %v437, %v424
    %v449 = vmul.f32 %v444, %v276
    %v450 = vadd.f32 %v448, %v449
    %452 = vrot.lane.b32.xlu0 %v439, 32
    %v453 = vpop.permute.xlu0 %452
    %s455 = scalar_lea.vmem [#allocation4], 2
    %456 = vst.msk [vmem:[%s455] sm:$0x3] %vm281, %v453
    %v457 = vld [vmem:[#allocation3 + $0xc] sm:$0x3]
    %459 = vrot.lane.b32.xlu0 %v358, 32
    %v460 = vpop.permute.xlu0 %459
    %v461 = vsel %vm123, %v460, 0
    %463 = vmatpush.msra.mxu0 0.0
    %464 = vmatpush.msra.mxu0 0.0
    %465 = vmatpush.msra.mxu0 0.0
    %466 = vmatpush.msra.mxu0 0.0
    %467 = vmatpush.msra.mxu0 0.0
    %468 = vmatpush.msra.mxu0 0.0
    %469 = vmatpush.msra.mxu0 0.0
    %470 = vmatpush.msra.mxu0 0.0
    %471 = vmatpush.msra.mxu0 0.0
    %472 = vmatpush.msra.mxu0 0.0
    %473 = vmatpush.msra.mxu0 0.0
    %474 = vmatpush.msra.mxu0 0.0
    %475 = vmatpush.msra.mxu0 %v195
    %476 = vmatpush.msra.mxu0 %v194
    %477 = vmatpush.msra.mxu0 %v193
    %478 = vmatpush.msra.mxu0 %v192
    %479 = vmatmul.f32.gmra.mxu0 %v461
    %v480 = vpop.f32.mrf.mxu0
    %v481 = vadd.f32 0.0, %v480
    %482 = vdwg.mxu0
    %v483 = vadd.f32 %v457, %v481
    %v484 = vxor.u32 %v483, 2147483648
    %v485 = vmul.f32 %v484, 1.442695
    %v486 = vpow.pop %v485
    %v487 = vadd.f32 %v486, 1.0
    %v488 = vrcp.pop %v487
    %v489 = vmul.f32 %v487, %v488
    %v490 = vsub.f32 1.0, %v489
    %v491 = vmul.f32 %v488, %v490
    %v492 = vadd.f32 %v488, %v491
    %vm493 = vweird.f32 %v487
    %vm494 = vweird.f32 %v488
    %vm495 = vmor %vm493, %vm494
    %v496 = vsel %vm495, %v488, %v492
    %v497 = vand.u32 2147483647, %v487
    %vm498 = vcmp.eq.f32.partialorder %v497, 8.507059e+37
    %v499 = vand.u32 %v487, 2147483648
    %v500 = vor.u32 1.1754944e-38, %v499
    %v501 = vsel %vm498, %v500, %v496
    %v502 = vmul.f32 1.0, %v501
    %v503 = vtanh.pop %v483
    %v504 = vmul.f32 %v502, %v360
    %506 = vrot.lane.b32.xlu0 %v503, 64
    %v507 = vpop.permute.xlu0 %506
    %v509 = vmul.f32 %v502, %v507
    %511 = vrot.lane.b32.xlu0 %v509, 32
    %v512 = vpop.permute.xlu0 %511
    %v514 = vadd.f32 %v504, %v512
    %v515 = vtanh.pop %v514
    %517 = vrot.lane.b32.xlu0 %v515, 64
    %v518 = vpop.permute.xlu0 %517
    %v520 = vmul.f32 %v502, %v518
    %vm521 = vcmp.gt.s32.totalorder %v112, 6
    %v522 = vsel %vm521, 1, 0
    %v523 = vcvt.s32.f32 %v522
    %525 = vset.pattern.permute.xlu0 0
    %526 = vperm.xlu0 %525, %v523
    %v527 = vpop.permute.xlu0 %526
    %v529 = vmul.f32 %v527, %v520
    %v530 = vsub.f32 1.0, %v523
    %532 = vset.pattern.permute.xlu0 0
    %533 = vperm.xlu0 %532, %v530
    %v534 = vpop.permute.xlu0 %533
    %v536 = vmul.f32 %v534, %v358
    %v537 = vadd.f32 %v529, %v536
    %v538 = vmul.f32 %v527, %v514
    %v539 = vmul.f32 %v534, %v360
    %v540 = vadd.f32 %v538, %v539
    %542 = vrot.lane.b32.xlu0 %v529, 32
    %v543 = vpop.permute.xlu0 %542
    %s545 = scalar_lea.vmem [#allocation5], 12
    %546 = vst.msk [vmem:[%s545] sm:$0x3] %vm281, %v543
    %v547 = vld [vmem:[#allocation2 + $0x4] sm:$0x3]
    %549 = vrot.lane.b32.xlu0 %v447, 32
    %v550 = vpop.permute.xlu0 %549
    %v551 = vsel %vm123, %v550, 0
    %553 = vmatpush.msra.mxu0 0.0
    %554 = vmatpush.msra.mxu0 0.0
    %555 = vmatpush.msra.mxu0 0.0
    %556 = vmatpush.msra.mxu0 0.0
    %557 = vmatpush.msra.mxu0 0.0
    %558 = vmatpush.msra.mxu0 0.0
    %559 = vmatpush.msra.mxu0 0.0
    %560 = vmatpush.msra.mxu0 0.0
    %561 = vmatpush.msra.mxu0 0.0
    %562 = vmatpush.msra.mxu0 0.0
    %563 = vmatpush.msra.mxu0 0.0
    %564 = vmatpush.msra.mxu0 0.0
    %565 = vmatpush.msra.mxu0 %v191
    %566 = vmatpush.msra.mxu0 %v190
    %567 = vmatpush.msra.mxu0 %v189
    %568 = vmatpush.msra.mxu0 %v188
    %569 = vmatmul.f32.gmra.mxu0 %v551
    %v570 = vpop.f32.mrf.mxu0
    %v571 = vadd.f32 0.0, %v570
    %572 = vdwg.mxu0
    %v573 = vadd.f32 %v547, %v571
    %v574 = vxor.u32 %v573, 2147483648
    %v575 = vmul.f32 %v574, 1.442695
    %v576 = vpow.pop %v575
    %v577 = vadd.f32 %v576, 1.0
    %v578 = vrcp.pop %v577
    %v579 = vmul.f32 %v577, %v578
    %v580 = vsub.f32 1.0, %v579
    %v581 = vmul.f32 %v578, %v580
    %v582 = vadd.f32 %v578, %v581
    %vm583 = vweird.f32 %v577
    %vm584 = vweird.f32 %v578
    %vm585 = vmor %vm583, %vm584
    %v586 = vsel %vm585, %v578, %v582
    %v587 = vand.u32 2147483647, %v577
    %vm588 = vcmp.eq.f32.partialorder %v587, 8.507059e+37
    %v589 = vand.u32 %v577, 2147483648
    %v590 = vor.u32 1.1754944e-38, %v589
    %v591 = vsel %vm588, %v590, %v586
    %v592 = vmul.f32 1.0, %v591
    %v593 = vtanh.pop %v573
    %v594 = vmul.f32 %v592, %v450
    %596 = vrot.lane.b32.xlu0 %v593, 64
    %v597 = vpop.permute.xlu0 %596
    %v599 = vmul.f32 %v592, %v597
    %601 = vrot.lane.b32.xlu0 %v599, 32
    %v602 = vpop.permute.xlu0 %601
    %v604 = vadd.f32 %v594, %v602
    %v605 = vtanh.pop %v604
    %607 = vrot.lane.b32.xlu0 %v605, 64
    %v608 = vpop.permute.xlu0 %607
    %v610 = vmul.f32 %v592, %v608
    %vm611 = vcmp.gt.s32.totalorder %v112, 2
    %v612 = vsel %vm611, 1, 0
    %v613 = vcvt.s32.f32 %v612
    %615 = vset.pattern.permute.xlu0 0
    %616 = vperm.xlu0 %615, %v613
    %v617 = vpop.permute.xlu0 %616
    %v619 = vmul.f32 %v617, %v610
    %v620 = vsub.f32 1.0, %v613
    %622 = vset.pattern.permute.xlu0 0
    %623 = vperm.xlu0 %622, %v620
    %v624 = vpop.permute.xlu0 %623
    %v626 = vmul.f32 %v624, %v447
    %v627 = vadd.f32 %v619, %v626
    %v628 = vmul.f32 %v617, %v604
    %v629 = vmul.f32 %v624, %v450
    %v630 = vadd.f32 %v628, %v629
    %632 = vrot.lane.b32.xlu0 %v619, 32
    %v633 = vpop.permute.xlu0 %632
    %s635 = scalar_lea.vmem [#allocation4], 4
    %636 = vst.msk [vmem:[%s635] sm:$0x3] %vm281, %v633
    %v637 = vld [vmem:[#allocation3 + $0xa] sm:$0x3]
    %639 = vrot.lane.b32.xlu0 %v537, 32
    %v640 = vpop.permute.xlu0 %639
    %v641 = vsel %vm123, %v640, 0
    %643 = vmatpush.msra.mxu0 0.0
    %644 = vmatpush.msra.mxu0 0.0
    %645 = vmatpush.msra.mxu0 0.0
    %646 = vmatpush.msra.mxu0 0.0
    %647 = vmatpush.msra.mxu0 0.0
    %648 = vmatpush.msra.mxu0 0.0
    %649 = vmatpush.msra.mxu0 0.0
    %650 = vmatpush.msra.mxu0 0.0
    %651 = vmatpush.msra.mxu0 0.0
    %652 = vmatpush.msra.mxu0 0.0
    %653 = vmatpush.msra.mxu0 0.0
    %654 = vmatpush.msra.mxu0 0.0
    %655 = vmatpush.msra.mxu0 %v195
    %656 = vmatpush.msra.mxu0 %v194
    %657 = vmatpush.msra.mxu0 %v193
    %658 = vmatpush.msra.mxu0 %v192
    %659 = vmatmul.f32.gmra.mxu0 %v641
    %v660 = vpop.f32.mrf.mxu0
    %v661 = vadd.f32 0.0, %v660
    %662 = vdwg.mxu0
    %v663 = vadd.f32 %v637, %v661
    %v664 = vxor.u32 %v663, 2147483648
    %v665 = vmul.f32 %v664, 1.442695
    %v666 = vpow.pop %v665
    %v667 = vadd.f32 %v666, 1.0
    %v668 = vrcp.pop %v667
    %v669 = vmul.f32 %v667, %v668
    %v670 = vsub.f32 1.0, %v669
    %v671 = vmul.f32 %v668, %v670
    %v672 = vadd.f32 %v668, %v671
    %vm673 = vweird.f32 %v667
    %vm674 = vweird.f32 %v668
    %vm675 = vmor %vm673, %vm674
    %v676 = vsel %vm675, %v668, %v672
    %v677 = vand.u32 2147483647, %v667
    %vm678 = vcmp.eq.f32.partialorder %v677, 8.507059e+37
    %v679 = vand.u32 %v667, 2147483648
    %v680 = vor.u32 1.1754944e-38, %v679
    %v681 = vsel %vm678, %v680, %v676
    %v682 = vmul.f32 1.0, %v681
    %v683 = vtanh.pop %v663
    %v684 = vmul.f32 %v682, %v540
    %686 = vrot.lane.b32.xlu0 %v683, 64
    %v687 = vpop.permute.xlu0 %686
    %v689 = vmul.f32 %v682, %v687
    %691 = vrot.lane.b32.xlu0 %v689, 32
    %v692 = vpop.permute.xlu0 %691
    %v694 = vadd.f32 %v684, %v692
    %v695 = vtanh.pop %v694
    %697 = vrot.lane.b32.xlu0 %v695, 64
    %v698 = vpop.permute.xlu0 %697
    %v700 = vmul.f32 %v682, %v698
    %vm701 = vcmp.gt.s32.totalorder %v112, 5
    %v702 = vsel %vm701, 1, 0
    %v703 = vcvt.s32.f32 %v702
    %705 = vset.pattern.permute.xlu0 0
    %706 = vperm.xlu0 %705, %v703
    %v707 = vpop.permute.xlu0 %706
    %v709 = vmul.f32 %v707, %v700
    %v710 = vsub.f32 1.0, %v703
    %712 = vset.pattern.permute.xlu0 0
    %713 = vperm.xlu0 %712, %v710
    %v714 = vpop.permute.xlu0 %713
    %v716 = vmul.f32 %v714, %v537
    %v717 = vadd.f32 %v709, %v716
    %v718 = vmul.f32 %v707, %v694
    %v719 = vmul.f32 %v714, %v540
    %v720 = vadd.f32 %v718, %v719
    %722 = vrot.lane.b32.xlu0 %v709, 32
    %v723 = vpop.permute.xlu0 %722
    %s725 = scalar_lea.vmem [#allocation5], 10
    %726 = vst.msk [vmem:[%s725] sm:$0x3] %vm281, %v723
    %v727 = vld [vmem:[#allocation2 + $0x6] sm:$0x3]
    %729 = vrot.lane.b32.xlu0 %v627, 32
    %v730 = vpop.permute.xlu0 %729
    %v731 = vsel %vm123, %v730, 0
    %733 = vmatpush.msra.mxu0 0.0
    %734 = vmatpush.msra.mxu0 0.0
    %735 = vmatpush.msra.mxu0 0.0
    %736 = vmatpush.msra.mxu0 0.0
    %737 = vmatpush.msra.mxu0 0.0
    %738 = vmatpush.msra.mxu0 0.0
    %739 = vmatpush.msra.mxu0 0.0
    %740 = vmatpush.msra.mxu0 0.0
    %741 = vmatpush.msra.mxu0 0.0
    %742 = vmatpush.msra.mxu0 0.0
    %743 = vmatpush.msra.mxu0 0.0
    %744 = vmatpush.msra.mxu0 0.0
    %745 = vmatpush.msra.mxu0 %v191
    %746 = vmatpush.msra.mxu0 %v190
    %747 = vmatpush.msra.mxu0 %v189
    %748 = vmatpush.msra.mxu0 %v188
    %749 = vmatmul.f32.gmra.mxu0 %v731
    %v750 = vpop.f32.mrf.mxu0
    %v751 = vadd.f32 0.0, %v750
    %752 = vdwg.mxu0
    %v753 = vadd.f32 %v727, %v751
    %v754 = vxor.u32 %v753, 2147483648
    %v755 = vmul.f32 %v754, 1.442695
    %v756 = vpow.pop %v755
    %v757 = vadd.f32 %v756, 1.0
    %v758 = vrcp.pop %v757
    %v759 = vmul.f32 %v757, %v758
    %v760 = vsub.f32 1.0, %v759
    %v761 = vmul.f32 %v758, %v760
    %v762 = vadd.f32 %v758, %v761
    %vm763 = vweird.f32 %v757
    %vm764 = vweird.f32 %v758
    %vm765 = vmor %vm763, %vm764
    %v766 = vsel %vm765, %v758, %v762
    %v767 = vand.u32 2147483647, %v757
    %vm768 = vcmp.eq.f32.partialorder %v767, 8.507059e+37
    %v769 = vand.u32 %v757, 2147483648
    %v770 = vor.u32 1.1754944e-38, %v769
    %v771 = vsel %vm768, %v770, %v766
    %v772 = vmul.f32 1.0, %v771
    %v773 = vtanh.pop %v753
    %v774 = vmul.f32 %v772, %v630
    %776 = vrot.lane.b32.xlu0 %v773, 64
    %v777 = vpop.permute.xlu0 %776
    %v779 = vmul.f32 %v772, %v777
    %781 = vrot.lane.b32.xlu0 %v779, 32
    %v782 = vpop.permute.xlu0 %781
    %v784 = vadd.f32 %v774, %v782
    %v785 = vtanh.pop %v784
    %787 = vrot.lane.b32.xlu0 %v785, 64
    %v788 = vpop.permute.xlu0 %787
    %v790 = vmul.f32 %v772, %v788
    %vm791 = vcmp.gt.s32.totalorder %v112, 3
    %v792 = vsel %vm791, 1, 0
    %v793 = vcvt.s32.f32 %v792
    %795 = vset.pattern.permute.xlu0 0
    %796 = vperm.xlu0 %795, %v793
    %v797 = vpop.permute.xlu0 %796
    %v799 = vmul.f32 %v797, %v790
    %v800 = vsub.f32 1.0, %v793
    %802 = vset.pattern.permute.xlu0 0
    %803 = vperm.xlu0 %802, %v800
    %v804 = vpop.permute.xlu0 %803
    %v806 = vmul.f32 %v804, %v627
    %v807 = vadd.f32 %v799, %v806
    %v808 = vmul.f32 %v797, %v784
    %v809 = vmul.f32 %v804, %v630
    %v810 = vadd.f32 %v808, %v809
    %812 = vrot.lane.b32.xlu0 %v799, 32
    %v813 = vpop.permute.xlu0 %812
    %s815 = scalar_lea.vmem [#allocation4], 6
    %816 = vst.msk [vmem:[%s815] sm:$0x3] %vm281, %v813
    %v817 = vld [vmem:[#allocation3 + $0x8] sm:$0x3]
    %819 = vrot.lane.b32.xlu0 %v717, 32
    %v820 = vpop.permute.xlu0 %819
    %v821 = vsel %vm123, %v820, 0
    %823 = vmatpush.msra.mxu0 0.0
    %824 = vmatpush.msra.mxu0 0.0
    %825 = vmatpush.msra.mxu0 0.0
    %826 = vmatpush.msra.mxu0 0.0
    %827 = vmatpush.msra.mxu0 0.0
    %828 = vmatpush.msra.mxu0 0.0
    %829 = vmatpush.msra.mxu0 0.0
    %830 = vmatpush.msra.mxu0 0.0
    %831 = vmatpush.msra.mxu0 0.0
    %832 = vmatpush.msra.mxu0 0.0
    %833 = vmatpush.msra.mxu0 0.0
    %834 = vmatpush.msra.mxu0 0.0
    %835 = vmatpush.msra.mxu0 %v195
    %836 = vmatpush.msra.mxu0 %v194
    %837 = vmatpush.msra.mxu0 %v193
    %838 = vmatpush.msra.mxu0 %v192
    %839 = vmatmul.f32.gmra.mxu0 %v821
    %v840 = vpop.f32.mrf.mxu0
    %v841 = vadd.f32 0.0, %v840
    %842 = vdwg.mxu0
    %v843 = vadd.f32 %v817, %v841
    %v844 = vxor.u32 %v843, 2147483648
    %v845 = vmul.f32 %v844, 1.442695
    %v846 = vpow.pop %v845
    %v847 = vadd.f32 %v846, 1.0
    %v848 = vrcp.pop %v847
    %v849 = vmul.f32 %v847, %v848
    %v850 = vsub.f32 1.0, %v849
    %v851 = vmul.f32 %v848, %v850
    %v852 = vadd.f32 %v848, %v851
    %vm853 = vweird.f32 %v847
    %vm854 = vweird.f32 %v848
    %vm855 = vmor %vm853, %vm854
    %v856 = vsel %vm855, %v848, %v852
    %v857 = vand.u32 2147483647, %v847
    %vm858 = vcmp.eq.f32.partialorder %v857, 8.507059e+37
    %v859 = vand.u32 %v847, 2147483648
    %v860 = vor.u32 1.1754944e-38, %v859
    %v861 = vsel %vm858, %v860, %v856
    %v862 = vmul.f32 1.0, %v861
    %v863 = vtanh.pop %v843
    %v864 = vmul.f32 %v862, %v720
    %866 = vrot.lane.b32.xlu0 %v863, 64
    %v867 = vpop.permute.xlu0 %866
    %v869 = vmul.f32 %v862, %v867
    %871 = vrot.lane.b32.xlu0 %v869, 32
    %v872 = vpop.permute.xlu0 %871
    %v874 = vadd.f32 %v864, %v872
    %v875 = vtanh.pop %v874
    %877 = vrot.lane.b32.xlu0 %v875, 64
    %v878 = vpop.permute.xlu0 %877
    %v880 = vmul.f32 %v862, %v878
    %vm881 = vcmp.gt.s32.totalorder %v112, 4
    %v882 = vsel %vm881, 1, 0
    %v883 = vcvt.s32.f32 %v882
    %885 = vset.pattern.permute.xlu0 0
    %886 = vperm.xlu0 %885, %v883
    %v887 = vpop.permute.xlu0 %886
    %v889 = vmul.f32 %v887, %v880
    %v890 = vsub.f32 1.0, %v883
    %892 = vset.pattern.permute.xlu0 0
    %893 = vperm.xlu0 %892, %v890
    %v894 = vpop.permute.xlu0 %893
    %v896 = vmul.f32 %v894, %v717
    %v897 = vadd.f32 %v889, %v896
    %v898 = vmul.f32 %v887, %v874
    %v899 = vmul.f32 %v894, %v720
    %v900 = vadd.f32 %v898, %v899
    %902 = vrot.lane.b32.xlu0 %v889, 32
    %v903 = vpop.permute.xlu0 %902
    %s905 = scalar_lea.vmem [#allocation5], 8
    %906 = vst.msk [vmem:[%s905] sm:$0x3] %vm281, %v903
    %v907 = vld [vmem:[#allocation2 + $0x8] sm:$0x3]
    %909 = vrot.lane.b32.xlu0 %v807, 32
    %v910 = vpop.permute.xlu0 %909
    %v911 = vsel %vm123, %v910, 0
    %913 = vmatpush.msra.mxu0 0.0
    %914 = vmatpush.msra.mxu0 0.0
    %915 = vmatpush.msra.mxu0 0.0
    %916 = vmatpush.msra.mxu0 0.0
    %917 = vmatpush.msra.mxu0 0.0
    %918 = vmatpush.msra.mxu0 0.0
    %919 = vmatpush.msra.mxu0 0.0
    %920 = vmatpush.msra.mxu0 0.0
    %921 = vmatpush.msra.mxu0 0.0
    %922 = vmatpush.msra.mxu0 0.0
    %923 = vmatpush.msra.mxu0 0.0
    %924 = vmatpush.msra.mxu0 0.0
    %925 = vmatpush.msra.mxu0 %v191
    %926 = vmatpush.msra.mxu0 %v190
    %927 = vmatpush.msra.mxu0 %v189
    %928 = vmatpush.msra.mxu0 %v188
    %929 = vmatmul.f32.gmra.mxu0 %v911
    %v930 = vpop.f32.mrf.mxu0
    %v931 = vadd.f32 0.0, %v930
    %932 = vdwg.mxu0
    %v933 = vadd.f32 %v907, %v931
    %v934 = vxor.u32 %v933, 2147483648
    %v935 = vmul.f32 %v934, 1.442695
    %v936 = vpow.pop %v935
    %v937 = vadd.f32 %v936, 1.0
    %v938 = vrcp.pop %v937
    %v939 = vmul.f32 %v937, %v938
    %v940 = vsub.f32 1.0, %v939
    %v941 = vmul.f32 %v938, %v940
    %v942 = vadd.f32 %v938, %v941
    %vm943 = vweird.f32 %v937
    %vm944 = vweird.f32 %v938
    %vm945 = vmor %vm943, %vm944
    %v946 = vsel %vm945, %v938, %v942
    %v947 = vand.u32 2147483647, %v937
    %vm948 = vcmp.eq.f32.partialorder %v947, 8.507059e+37
    %v949 = vand.u32 %v937, 2147483648
    %v950 = vor.u32 1.1754944e-38, %v949
    %v951 = vsel %vm948, %v950, %v946
    %v952 = vmul.f32 1.0, %v951
    %v953 = vtanh.pop %v933
    %v954 = vmul.f32 %v952, %v810
    %956 = vrot.lane.b32.xlu0 %v953, 64
    %v957 = vpop.permute.xlu0 %956
    %v959 = vmul.f32 %v952, %v957
    %961 = vrot.lane.b32.xlu0 %v959, 32
    %v962 = vpop.permute.xlu0 %961
    %v964 = vadd.f32 %v954, %v962
    %v965 = vtanh.pop %v964
    %967 = vrot.lane.b32.xlu0 %v965, 64
    %v968 = vpop.permute.xlu0 %967
    %v970 = vmul.f32 %v952, %v968
    %v971 = vmul.f32 %v887, %v970
    %v972 = vmul.f32 %v894, %v807
    %v973 = vadd.f32 %v971, %v972
    %v974 = vmul.f32 %v887, %v964
    %v975 = vmul.f32 %v894, %v810
    %v976 = vadd.f32 %v974, %v975
    %978 = vrot.lane.b32.xlu0 %v971, 32
    %v979 = vpop.permute.xlu0 %978
    %s981 = scalar_lea.vmem [#allocation4], 8
    %982 = vst.msk [vmem:[%s981] sm:$0x3] %vm281, %v979
    %v983 = vld [vmem:[#allocation3 + $0x6] sm:$0x3]
    %985 = vrot.lane.b32.xlu0 %v897, 32
    %v986 = vpop.permute.xlu0 %985
    %v987 = vsel %vm123, %v986, 0
    %989 = vmatpush.msra.mxu0 0.0
    %990 = vmatpush.msra.mxu0 0.0
    %991 = vmatpush.msra.mxu0 0.0
    %992 = vmatpush.msra.mxu0 0.0
    %993 = vmatpush.msra.mxu0 0.0
    %994 = vmatpush.msra.mxu0 0.0
    %995 = vmatpush.msra.mxu0 0.0
    %996 = vmatpush.msra.mxu0 0.0
    %997 = vmatpush.msra.mxu0 0.0
    %998 = vmatpush.msra.mxu0 0.0
    %999 = vmatpush.msra.mxu0 0.0
    %1000 = vmatpush.msra.mxu0 0.0
    %1001 = vmatpush.msra.mxu0 %v195
    %1002 = vmatpush.msra.mxu0 %v194
    %1003 = vmatpush.msra.mxu0 %v193
    %1004 = vmatpush.msra.mxu0 %v192
    %1005 = vmatmul.f32.gmra.mxu0 %v987
    %v1006 = vpop.f32.mrf.mxu0
    %v1007 = vadd.f32 0.0, %v1006
    %1008 = vdwg.mxu0
    %v1009 = vadd.f32 %v983, %v1007
    %v1010 = vxor.u32 %v1009, 2147483648
    %v1011 = vmul.f32 %v1010, 1.442695
    %v1012 = vpow.pop %v1011
    %v1013 = vadd.f32 %v1012, 1.0
    %v1014 = vrcp.pop %v1013
    %v1015 = vmul.f32 %v1013, %v1014
    %v1016 = vsub.f32 1.0, %v1015
    %v1017 = vmul.f32 %v1014, %v1016
    %v1018 = vadd.f32 %v1014, %v1017
    %vm1019 = vweird.f32 %v1013
    %vm1020 = vweird.f32 %v1014
    %vm1021 = vmor %vm1019, %vm1020
    %v1022 = vsel %vm1021, %v1014, %v1018
    %v1023 = vand.u32 2147483647, %v1013
    %vm1024 = vcmp.eq.f32.partialorder %v1023, 8.507059e+37
    %v1025 = vand.u32 %v1013, 2147483648
    %v1026 = vor.u32 1.1754944e-38, %v1025
    %v1027 = vsel %vm1024, %v1026, %v1022
    %v1028 = vmul.f32 1.0, %v1027
    %v1029 = vtanh.pop %v1009
    %v1030 = vmul.f32 %v1028, %v900
    %1032 = vrot.lane.b32.xlu0 %v1029, 64
    %v1033 = vpop.permute.xlu0 %1032
    %v1035 = vmul.f32 %v1028, %v1033
    %1037 = vrot.lane.b32.xlu0 %v1035, 32
    %v1038 = vpop.permute.xlu0 %1037
    %v1040 = vadd.f32 %v1030, %v1038
    %v1041 = vtanh.pop %v1040
    %1043 = vrot.lane.b32.xlu0 %v1041, 64
    %v1044 = vpop.permute.xlu0 %1043
    %v1046 = vmul.f32 %v1028, %v1044
    %v1047 = vmul.f32 %v797, %v1046
    %v1048 = vmul.f32 %v804, %v897
    %v1049 = vadd.f32 %v1047, %v1048
    %v1050 = vmul.f32 %v797, %v1040
    %v1051 = vmul.f32 %v804, %v900
    %v1052 = vadd.f32 %v1050, %v1051
    %1054 = vrot.lane.b32.xlu0 %v1047, 32
    %v1055 = vpop.permute.xlu0 %1054
    %s1057 = scalar_lea.vmem [#allocation5], 6
    %1058 = vst.msk [vmem:[%s1057] sm:$0x3] %vm281, %v1055
    %v1059 = vld [vmem:[#allocation2 + $0xa] sm:$0x3]
    %1061 = vrot.lane.b32.xlu0 %v973, 32
    %v1062 = vpop.permute.xlu0 %1061
    %v1063 = vsel %vm123, %v1062, 0
    %1065 = vmatpush.msra.mxu0 0.0
    %1066 = vmatpush.msra.mxu0 0.0
    %1067 = vmatpush.msra.mxu0 0.0
    %1068 = vmatpush.msra.mxu0 0.0
    %1069 = vmatpush.msra.mxu0 0.0
    %1070 = vmatpush.msra.mxu0 0.0
    %1071 = vmatpush.msra.mxu0 0.0
    %1072 = vmatpush.msra.mxu0 0.0
    %1073 = vmatpush.msra.mxu0 0.0
    %1074 = vmatpush.msra.mxu0 0.0
    %1075 = vmatpush.msra.mxu0 0.0
    %1076 = vmatpush.msra.mxu0 0.0
    %1077 = vmatpush.msra.mxu0 %v191
    %1078 = vmatpush.msra.mxu0 %v190
    %1079 = vmatpush.msra.mxu0 %v189
    %1080 = vmatpush.msra.mxu0 %v188
    %1081 = vmatmul.f32.gmra.mxu0 %v1063
    %v1082 = vpop.f32.mrf.mxu0
    %v1083 = vadd.f32 0.0, %v1082
    %1084 = vdwg.mxu0
    %v1085 = vadd.f32 %v1059, %v1083
    %v1086 = vxor.u32 %v1085, 2147483648
    %v1087 = vmul.f32 %v1086, 1.442695
    %v1088 = vpow.pop %v1087
    %v1089 = vadd.f32 %v1088, 1.0
    %v1090 = vrcp.pop %v1089
    %v1091 = vmul.f32 %v1089, %v1090
    %v1092 = vsub.f32 1.0, %v1091
    %v1093 = vmul.f32 %v1090, %v1092
    %v1094 = vadd.f32 %v1090, %v1093
    %vm1095 = vweird.f32 %v1089
    %vm1096 = vweird.f32 %v1090
    %vm1097 = vmor %vm1095, %vm1096
    %v1098 = vsel %vm1097, %v1090, %v1094
    %v1099 = vand.u32 2147483647, %v1089
    %vm1100 = vcmp.eq.f32.partialorder %v1099, 8.507059e+37
    %v1101 = vand.u32 %v1089, 2147483648
    %v1102 = vor.u32 1.1754944e-38, %v1101
    %v1103 = vsel %vm1100, %v1102, %v1098
    %v1104 = vmul.f32 1.0, %v1103
    %v1105 = vtanh.pop %v1085
    %v1106 = vmul.f32 %v1104, %v976
    %1108 = vrot.lane.b32.xlu0 %v1105, 64
    %v1109 = vpop.permute.xlu0 %1108
    %v1111 = vmul.f32 %v1104, %v1109
    %1113 = vrot.lane.b32.xlu0 %v1111, 32
    %v1114 = vpop.permute.xlu0 %1113
    %v1116 = vadd.f32 %v1106, %v1114
    %v1117 = vtanh.pop %v1116
    %1119 = vrot.lane.b32.xlu0 %v1117, 64
    %v1120 = vpop.permute.xlu0 %1119
    %v1122 = vmul.f32 %v1104, %v1120
    %v1123 = vmul.f32 %v707, %v1122
    %v1124 = vmul.f32 %v714, %v973
    %v1125 = vadd.f32 %v1123, %v1124
    %v1126 = vmul.f32 %v707, %v1116
    %v1127 = vmul.f32 %v714, %v976
    %v1128 = vadd.f32 %v1126, %v1127
    %1130 = vrot.lane.b32.xlu0 %v1123, 32
    %v1131 = vpop.permute.xlu0 %1130
    %s1133 = scalar_lea.vmem [#allocation4], 10
    %1134 = vst.msk [vmem:[%s1133] sm:$0x3] %vm281, %v1131
    %v1135 = vld [vmem:[#allocation3 + $0x4] sm:$0x3]
    %1137 = vrot.lane.b32.xlu0 %v1049, 32
    %v1138 = vpop.permute.xlu0 %1137
    %v1139 = vsel %vm123, %v1138, 0
    %1141 = vmatpush.msra.mxu0 0.0
    %1142 = vmatpush.msra.mxu0 0.0
    %1143 = vmatpush.msra.mxu0 0.0
    %1144 = vmatpush.msra.mxu0 0.0
    %1145 = vmatpush.msra.mxu0 0.0
    %1146 = vmatpush.msra.mxu0 0.0
    %1147 = vmatpush.msra.mxu0 0.0
    %1148 = vmatpush.msra.mxu0 0.0
    %1149 = vmatpush.msra.mxu0 0.0
    %1150 = vmatpush.msra.mxu0 0.0
    %1151 = vmatpush.msra.mxu0 0.0
    %1152 = vmatpush.msra.mxu0 0.0
    %1153 = vmatpush.msra.mxu0 %v195
    %1154 = vmatpush.msra.mxu0 %v194
    %1155 = vmatpush.msra.mxu0 %v193
    %1156 = vmatpush.msra.mxu0 %v192
    %1157 = vmatmul.f32.gmra.mxu0 %v1139
    %v1158 = vpop.f32.mrf.mxu0
    %v1159 = vadd.f32 0.0, %v1158
    %1160 = vdwg.mxu0
    %v1161 = vadd.f32 %v1135, %v1159
    %v1162 = vxor.u32 %v1161, 2147483648
    %v1163 = vmul.f32 %v1162, 1.442695
    %v1164 = vpow.pop %v1163
    %v1165 = vadd.f32 %v1164, 1.0
    %v1166 = vrcp.pop %v1165
    %v1167 = vmul.f32 %v1165, %v1166
    %v1168 = vsub.f32 1.0, %v1167
    %v1169 = vmul.f32 %v1166, %v1168
    %v1170 = vadd.f32 %v1166, %v1169
    %vm1171 = vweird.f32 %v1165
    %vm1172 = vweird.f32 %v1166
    %vm1173 = vmor %vm1171, %vm1172
    %v1174 = vsel %vm1173, %v1166, %v1170
    %v1175 = vand.u32 2147483647, %v1165
    %vm1176 = vcmp.eq.f32.partialorder %v1175, 8.507059e+37
    %v1177 = vand.u32 %v1165, 2147483648
    %v1178 = vor.u32 1.1754944e-38, %v1177
    %v1179 = vsel %vm1176, %v1178, %v1174
    %v1180 = vmul.f32 1.0, %v1179
    %v1181 = vtanh.pop %v1161
    %v1182 = vmul.f32 %v1180, %v1052
    %1184 = vrot.lane.b32.xlu0 %v1181, 64
    %v1185 = vpop.permute.xlu0 %1184
    %v1187 = vmul.f32 %v1180, %v1185
    %1189 = vrot.lane.b32.xlu0 %v1187, 32
    %v1190 = vpop.permute.xlu0 %1189
    %v1192 = vadd.f32 %v1182, %v1190
    %v1193 = vtanh.pop %v1192
    %1195 = vrot.lane.b32.xlu0 %v1193, 64
    %v1196 = vpop.permute.xlu0 %1195
    %v1198 = vmul.f32 %v1180, %v1196
    %v1199 = vmul.f32 %v617, %v1198
    %v1200 = vmul.f32 %v624, %v1049
    %v1201 = vadd.f32 %v1199, %v1200
    %v1202 = vmul.f32 %v617, %v1192
    %v1203 = vmul.f32 %v624, %v1052
    %v1204 = vadd.f32 %v1202, %v1203
    %1206 = vrot.lane.b32.xlu0 %v1199, 32
    %v1207 = vpop.permute.xlu0 %1206
    %s1209 = scalar_lea.vmem [#allocation5], 4
    %1210 = vst.msk [vmem:[%s1209] sm:$0x3] %vm281, %v1207
    %v1211 = vld [vmem:[#allocation2 + $0xc] sm:$0x3]
    %1213 = vrot.lane.b32.xlu0 %v1125, 32
    %v1214 = vpop.permute.xlu0 %1213
    %v1215 = vsel %vm123, %v1214, 0
    %1217 = vmatpush.msra.mxu0 0.0
    %1218 = vmatpush.msra.mxu0 0.0
    %1219 = vmatpush.msra.mxu0 0.0
    %1220 = vmatpush.msra.mxu0 0.0
    %1221 = vmatpush.msra.mxu0 0.0
    %1222 = vmatpush.msra.mxu0 0.0
    %1223 = vmatpush.msra.mxu0 0.0
    %1224 = vmatpush.msra.mxu0 0.0
    %1225 = vmatpush.msra.mxu0 0.0
    %1226 = vmatpush.msra.mxu0 0.0
    %1227 = vmatpush.msra.mxu0 0.0
    %1228 = vmatpush.msra.mxu0 0.0
    %1229 = vmatpush.msra.mxu0 %v191
    %1230 = vmatpush.msra.mxu0 %v190
    %1231 = vmatpush.msra.mxu0 %v189
    %1232 = vmatpush.msra.mxu0 %v188
    %1233 = vmatmul.f32.gmra.mxu0 %v1215
    %v1234 = vpop.f32.mrf.mxu0
    %v1235 = vadd.f32 0.0, %v1234
    %1236 = vdwg.mxu0
    %v1237 = vadd.f32 %v1211, %v1235
    %v1238 = vxor.u32 %v1237, 2147483648
    %v1239 = vmul.f32 %v1238, 1.442695
    %v1240 = vpow.pop %v1239
    %v1241 = vadd.f32 %v1240, 1.0
    %v1242 = vrcp.pop %v1241
    %v1243 = vmul.f32 %v1241, %v1242
    %v1244 = vsub.f32 1.0, %v1243
    %v1245 = vmul.f32 %v1242, %v1244
    %v1246 = vadd.f32 %v1242, %v1245
    %vm1247 = vweird.f32 %v1241
    %vm1248 = vweird.f32 %v1242
    %vm1249 = vmor %vm1247, %vm1248
    %v1250 = vsel %vm1249, %v1242, %v1246
    %v1251 = vand.u32 2147483647, %v1241
    %vm1252 = vcmp.eq.f32.partialorder %v1251, 8.507059e+37
    %v1253 = vand.u32 %v1241, 2147483648
    %v1254 = vor.u32 1.1754944e-38, %v1253
    %v1255 = vsel %vm1252, %v1254, %v1250
    %v1256 = vmul.f32 1.0, %v1255
    %v1257 = vtanh.pop %v1237
    %v1258 = vmul.f32 %v1256, %v1128
    %1260 = vrot.lane.b32.xlu0 %v1257, 64
    %v1261 = vpop.permute.xlu0 %1260
    %v1263 = vmul.f32 %v1256, %v1261
    %1265 = vrot.lane.b32.xlu0 %v1263, 32
    %v1266 = vpop.permute.xlu0 %1265
    %v1268 = vadd.f32 %v1258, %v1266
    %v1269 = vtanh.pop %v1268
    %1271 = vrot.lane.b32.xlu0 %v1269, 64
    %v1272 = vpop.permute.xlu0 %1271
    %v1274 = vmul.f32 %v1256, %v1272
    %v1275 = vmul.f32 %v527, %v1274
    %v1276 = vmul.f32 %v534, %v1125
    %v1277 = vadd.f32 %v1275, %v1276
    %v1278 = vmul.f32 %v527, %v1268
    %v1279 = vmul.f32 %v534, %v1128
    %v1280 = vadd.f32 %v1278, %v1279
    %1282 = vrot.lane.b32.xlu0 %v1275, 32
    %v1283 = vpop.permute.xlu0 %1282
    %s1285 = scalar_lea.vmem [#allocation4], 12
    %1286 = vst.msk [vmem:[%s1285] sm:$0x3] %vm281, %v1283
    %v1287 = vld [vmem:[#allocation3 + $0x2] sm:$0x3]
    %1289 = vrot.lane.b32.xlu0 %v1201, 32
    %v1290 = vpop.permute.xlu0 %1289
    %v1291 = vsel %vm123, %v1290, 0
    %1293 = vmatpush.msra.mxu0 0.0
    %1294 = vmatpush.msra.mxu0 0.0
    %1295 = vmatpush.msra.mxu0 0.0
    %1296 = vmatpush.msra.mxu0 0.0
    %1297 = vmatpush.msra.mxu0 0.0
    %1298 = vmatpush.msra.mxu0 0.0
    %1299 = vmatpush.msra.mxu0 0.0
    %1300 = vmatpush.msra.mxu0 0.0
    %1301 = vmatpush.msra.mxu0 0.0
    %1302 = vmatpush.msra.mxu0 0.0
    %1303 = vmatpush.msra.mxu0 0.0
    %1304 = vmatpush.msra.mxu0 0.0
    %1305 = vmatpush.msra.mxu0 %v195
    %1306 = vmatpush.msra.mxu0 %v194
    %1307 = vmatpush.msra.mxu0 %v193
    %1308 = vmatpush.msra.mxu0 %v192
    %1309 = vmatmul.f32.gmra.mxu0 %v1291
    %v1310 = vpop.f32.mrf.mxu0
    %v1311 = vadd.f32 0.0, %v1310
    %1312 = vdwg.mxu0
    %v1313 = vadd.f32 %v1287, %v1311
    %v1314 = vxor.u32 %v1313, 2147483648
    %v1315 = vmul.f32 %v1314, 1.442695
    %v1316 = vpow.pop %v1315
    %v1317 = vadd.f32 %v1316, 1.0
    %v1318 = vrcp.pop %v1317
    %v1319 = vmul.f32 %v1317, %v1318
    %v1320 = vsub.f32 1.0, %v1319
    %v1321 = vmul.f32 %v1318, %v1320
    %v1322 = vadd.f32 %v1318, %v1321
    %vm1323 = vweird.f32 %v1317
    %vm1324 = vweird.f32 %v1318
    %vm1325 = vmor %vm1323, %vm1324
    %v1326 = vsel %vm1325, %v1318, %v1322
    %v1327 = vand.u32 2147483647, %v1317
    %vm1328 = vcmp.eq.f32.partialorder %v1327, 8.507059e+37
    %v1329 = vand.u32 %v1317, 2147483648
    %v1330 = vor.u32 1.1754944e-38, %v1329
    %v1331 = vsel %vm1328, %v1330, %v1326
    %v1332 = vmul.f32 1.0, %v1331
    %v1333 = vtanh.pop %v1313
    %v1334 = vmul.f32 %v1332, %v1204
    %1336 = vrot.lane.b32.xlu0 %v1333, 64
    %v1337 = vpop.permute.xlu0 %1336
    %v1339 = vmul.f32 %v1332, %v1337
    %1341 = vrot.lane.b32.xlu0 %v1339, 32
    %v1342 = vpop.permute.xlu0 %1341
    %v1344 = vadd.f32 %v1334, %v1342
    %v1345 = vtanh.pop %v1344
    %1347 = vrot.lane.b32.xlu0 %v1345, 64
    %v1348 = vpop.permute.xlu0 %1347
    %v1350 = vmul.f32 %v1332, %v1348
    %v1351 = vmul.f32 %v437, %v1350
    %v1352 = vmul.f32 %v444, %v1201
    %v1353 = vadd.f32 %v1351, %v1352
    %v1354 = vmul.f32 %v437, %v1344
    %v1355 = vmul.f32 %v444, %v1204
    %v1356 = vadd.f32 %v1354, %v1355
    %1358 = vrot.lane.b32.xlu0 %v1351, 32
    %v1359 = vpop.permute.xlu0 %1358
    %s1361 = scalar_lea.vmem [#allocation5], 2
    %1362 = vst.msk [vmem:[%s1361] sm:$0x3] %vm281, %v1359
    %v1363 = vld [vmem:[#allocation2 + $0xe] sm:$0x3]
    %1365 = vrot.lane.b32.xlu0 %v1277, 32
    %v1366 = vpop.permute.xlu0 %1365
    %v1367 = vsel %vm123, %v1366, 0
    %1369 = vmatpush.msra.mxu0 0.0
    %1370 = vmatpush.msra.mxu0 0.0
    %1371 = vmatpush.msra.mxu0 0.0
    %1372 = vmatpush.msra.mxu0 0.0
    %1373 = vmatpush.msra.mxu0 0.0
    %1374 = vmatpush.msra.mxu0 0.0
    %1375 = vmatpush.msra.mxu0 0.0
    %1376 = vmatpush.msra.mxu0 0.0
    %1377 = vmatpush.msra.mxu0 0.0
    %1378 = vmatpush.msra.mxu0 0.0
    %1379 = vmatpush.msra.mxu0 0.0
    %1380 = vmatpush.msra.mxu0 0.0
    %1381 = vmatpush.msra.mxu0 %v191
    %1382 = vmatpush.msra.mxu0 %v190
    %1383 = vmatpush.msra.mxu0 %v189
    %1384 = vmatpush.msra.mxu0 %v188
    %1385 = vmatmul.f32.gmra.mxu0 %v1367
    %v1386 = vpop.f32.mrf.mxu0
    %v1387 = vadd.f32 0.0, %v1386
    %1388 = vdwg.mxu0
    %v1389 = vadd.f32 %v1363, %v1387
    %v1390 = vxor.u32 %v1389, 2147483648
    %v1391 = vmul.f32 %v1390, 1.442695
    %v1392 = vpow.pop %v1391
    %v1393 = vadd.f32 %v1392, 1.0
    %v1394 = vrcp.pop %v1393
    %v1395 = vmul.f32 %v1393, %v1394
    %v1396 = vsub.f32 1.0, %v1395
    %v1397 = vmul.f32 %v1394, %v1396
    %v1398 = vadd.f32 %v1394, %v1397
    %vm1399 = vweird.f32 %v1393
    %vm1400 = vweird.f32 %v1394
    %vm1401 = vmor %vm1399, %vm1400
    %v1402 = vsel %vm1401, %v1394, %v1398
    %v1403 = vand.u32 2147483647, %v1393
    %vm1404 = vcmp.eq.f32.partialorder %v1403, 8.507059e+37
    %v1405 = vand.u32 %v1393, 2147483648
    %v1406 = vor.u32 1.1754944e-38, %v1405
    %v1407 = vsel %vm1404, %v1406, %v1402
    %v1408 = vmul.f32 1.0, %v1407
    %v1409 = vtanh.pop %v1389
    %v1410 = vmul.f32 %v1408, %v1280
    %1412 = vrot.lane.b32.xlu0 %v1409, 64
    %v1413 = vpop.permute.xlu0 %1412
    %v1415 = vmul.f32 %v1408, %v1413
    %1417 = vrot.lane.b32.xlu0 %v1415, 32
    %v1418 = vpop.permute.xlu0 %1417
    %v1420 = vadd.f32 %v1410, %v1418
    %v1421 = vtanh.pop %v1420
    %1423 = vrot.lane.b32.xlu0 %v1421, 64
    %v1424 = vpop.permute.xlu0 %1423
    %v1426 = vmul.f32 %v1408, %v1424
    %v1427 = vmul.f32 %v348, %v1426
    %v1428 = vmul.f32 %v355, %v1277
    %v1429 = vadd.f32 %v1427, %v1428
    %v1430 = vmul.f32 %v348, %v1420
    %v1431 = vmul.f32 %v355, %v1280
    %v1432 = vadd.f32 %v1430, %v1431
    %1434 = vrot.lane.b32.xlu0 %v1427, 32
    %v1435 = vpop.permute.xlu0 %1434
    %s1437 = scalar_lea.vmem [#allocation4], 14
    %1438 = vst.msk [vmem:[%s1437] sm:$0x3] %vm281, %v1435
    %v1439 = vld [vmem:[#allocation3] sm:$0x3]
    %1441 = vrot.lane.b32.xlu0 %v1353, 32
    %v1442 = vpop.permute.xlu0 %1441
    %v1443 = vsel %vm123, %v1442, 0
    %1445 = vmatpush.msra.mxu0 0.0
    %1446 = vmatpush.msra.mxu0 0.0
    %1447 = vmatpush.msra.mxu0 0.0
    %1448 = vmatpush.msra.mxu0 0.0
    %1449 = vmatpush.msra.mxu0 0.0
    %1450 = vmatpush.msra.mxu0 0.0
    %1451 = vmatpush.msra.mxu0 0.0
    %1452 = vmatpush.msra.mxu0 0.0
    %1453 = vmatpush.msra.mxu0 0.0
    %1454 = vmatpush.msra.mxu0 0.0
    %1455 = vmatpush.msra.mxu0 0.0
    %1456 = vmatpush.msra.mxu0 0.0
    %1457 = vmatpush.msra.mxu0 %v195
    %1458 = vmatpush.msra.mxu0 %v194
    %1459 = vmatpush.msra.mxu0 %v193
    %1460 = vmatpush.msra.mxu0 %v192
    %1461 = vmatmul.f32.gmra.mxu0 %v1443
    %v1462 = vpop.f32.mrf.mxu0
    %v1463 = vadd.f32 0.0, %v1462
    %1464 = vdwg.mxu0
    %v1465 = vadd.f32 %v1439, %v1463
    %v1466 = vxor.u32 %v1465, 2147483648
    %v1467 = vmul.f32 %v1466, 1.442695
    %v1468 = vpow.pop %v1467
    %v1469 = vadd.f32 %v1468, 1.0
    %v1470 = vrcp.pop %v1469
    %v1471 = vmul.f32 %v1469, %v1470
    %v1472 = vsub.f32 1.0, %v1471
    %v1473 = vmul.f32 %v1470, %v1472
    %v1474 = vadd.f32 %v1470, %v1473
    %vm1475 = vweird.f32 %v1469
    %vm1476 = vweird.f32 %v1470
    %vm1477 = vmor %vm1475, %vm1476
    %v1478 = vsel %vm1477, %v1470, %v1474
    %v1479 = vand.u32 2147483647, %v1469
    %vm1480 = vcmp.eq.f32.partialorder %v1479, 8.507059e+37
    %v1481 = vand.u32 %v1469, 2147483648
    %v1482 = vor.u32 1.1754944e-38, %v1481
    %v1483 = vsel %vm1480, %v1482, %v1478
    %v1484 = vmul.f32 1.0, %v1483
    %v1485 = vtanh.pop %v1465
    %v1486 = vmul.f32 %v1484, %v1356
    %1488 = vrot.lane.b32.xlu0 %v1485, 64
    %v1489 = vpop.permute.xlu0 %1488
    %v1491 = vmul.f32 %v1484, %v1489
    %1493 = vrot.lane.b32.xlu0 %v1491, 32
    %v1494 = vpop.permute.xlu0 %1493
    %v1496 = vadd.f32 %v1486, %v1494
    %v1497 = vtanh.pop %v1496
    %1499 = vrot.lane.b32.xlu0 %v1497, 64
    %v1500 = vpop.permute.xlu0 %1499
    %v1502 = vmul.f32 %v1484, %v1500
    %v1503 = vmul.f32 %v264, %v1502
    %v1504 = vmul.f32 %v271, %v1353
    %v1505 = vadd.f32 %v1503, %v1504
    %v1506 = vmul.f32 %v264, %v1496
    %v1507 = vmul.f32 %v271, %v1356
    %v1508 = vadd.f32 %v1506, %v1507
    %1510 = vrot.lane.b32.xlu0 %v1503, 32
    %v1511 = vpop.permute.xlu0 %1510
    %1513 = vst.msk [vmem:[#allocation5] sm:$0x3] %vm281, %v1511
    %v1514 = vld [vmem:[#allocation4] sm:$0x3]
    %v1515 = vld [vmem:[#allocation4 + $0x2] sm:$0x3]
    %v1516 = vld [vmem:[#allocation4 + $0x4] sm:$0x3]
    %v1517 = vld [vmem:[#allocation4 + $0x6] sm:$0x3]
    %v1518 = vld [vmem:[#allocation4 + $0x8] sm:$0x3]
    %v1519 = vld [vmem:[#allocation4 + $0xa] sm:$0x3]
    %v1520 = vld [vmem:[#allocation4 + $0xc] sm:$0x3]
    %v1521 = vld [vmem:[#allocation4 + $0xe] sm:$0x3]
    %1522 = vst.msk [vmem:[#allocation15] sm:$0x3] %vm281, %v1514
    %1523 = vst.msk [vmem:[#allocation15 + $0x2] sm:$0x3] %vm281, %v1515
    %1524 = vst.msk [vmem:[#allocation15 + $0x4] sm:$0x3] %vm281, %v1516
    %1525 = vst.msk [vmem:[#allocation15 + $0x6] sm:$0x3] %vm281, %v1517
    %1526 = vst.msk [vmem:[#allocation15 + $0x8] sm:$0x3] %vm281, %v1518
    %1527 = vst.msk [vmem:[#allocation15 + $0xa] sm:$0x3] %vm281, %v1519
    %1528 = vst.msk [vmem:[#allocation15 + $0xc] sm:$0x3] %vm281, %v1520
    %1529 = vst.msk [vmem:[#allocation15 + $0xe] sm:$0x3] %vm281, %v1521
    %v1530 = vld [vmem:[#allocation5] sm:$0x3]
    %v1531 = vld [vmem:[#allocation5 + $0x2] sm:$0x3]
    %v1532 = vld [vmem:[#allocation5 + $0x4] sm:$0x3]
    %v1533 = vld [vmem:[#allocation5 + $0x6] sm:$0x3]
    %v1534 = vld [vmem:[#allocation5 + $0x8] sm:$0x3]
    %v1535 = vld [vmem:[#allocation5 + $0xa] sm:$0x3]
    %v1536 = vld [vmem:[#allocation5 + $0xc] sm:$0x3]
    %v1537 = vld [vmem:[#allocation5 + $0xe] sm:$0x3]
    %1546 = vrot.lane.b32.xlu0 %v1530, 32
    %v1547 = vpop.permute.xlu0 %1546
    %1548 = vrot.lane.b32.xlu0 %v1531, 32
    %v1549 = vpop.permute.xlu0 %1548
    %1550 = vrot.lane.b32.xlu0 %v1532, 32
    %v1551 = vpop.permute.xlu0 %1550
    %1552 = vrot.lane.b32.xlu0 %v1533, 32
    %v1553 = vpop.permute.xlu0 %1552
    %1554 = vrot.lane.b32.xlu0 %v1534, 32
    %v1555 = vpop.permute.xlu0 %1554
    %1556 = vrot.lane.b32.xlu0 %v1535, 32
    %v1557 = vpop.permute.xlu0 %1556
    %1558 = vrot.lane.b32.xlu0 %v1536, 32
    %v1559 = vpop.permute.xlu0 %1558
    %1560 = vrot.lane.b32.xlu0 %v1537, 32
    %v1561 = vpop.permute.xlu0 %1560
    %vm1570 = vcmask 517376
    %1571 = vst.msk [vmem:[#allocation15] sm:$0x3] %vm1570, %v1547
    %1572 = vst.msk [vmem:[#allocation15 + $0x2] sm:$0x3] %vm1570, %v1549
    %1573 = vst.msk [vmem:[#allocation15 + $0x4] sm:$0x3] %vm1570, %v1551
    %1574 = vst.msk [vmem:[#allocation15 + $0x6] sm:$0x3] %vm1570, %v1553
    %1575 = vst.msk [vmem:[#allocation15 + $0x8] sm:$0x3] %vm1570, %v1555
    %1576 = vst.msk [vmem:[#allocation15 + $0xa] sm:$0x3] %vm1570, %v1557
    %1577 = vst.msk [vmem:[#allocation15 + $0xc] sm:$0x3] %vm1570, %v1559
    %1578 = vst.msk [vmem:[#allocation15 + $0xe] sm:$0x3] %vm1570, %v1561
    %1580 = vrot.lane.b32.xlu0 %v1429, 32
    %v1581 = vpop.permute.xlu0 %1580
    %1583 = vst.msk [vmem:[#allocation16] sm:$0x3] %vm281, %v1581
    %1585 = vrot.lane.b32.xlu0 %v1505, 64
    %v1586 = vpop.permute.xlu0 %1585
    %1588 = vst.msk [vmem:[#allocation16] sm:$0x3] %vm1570, %v1586
    %1590 = vrot.lane.b32.xlu0 %v1432, 96
    %v1591 = vpop.permute.xlu0 %1590
    %1593 = vst.msk [vmem:[#allocation18] sm:$0x3] %vm281, %v1591
    %1594 = vst.msk [vmem:[#allocation18] sm:$0x3] %vm1570, %v1508
    // Predicated region
    $region54: #{tpu_custom_call.1} parent=1 // pred_check
      _
    $region55: #{tpu_custom_call.1} parent=1 // pred_check_branch
      %1596 = sbr.rel (0) target = $region57
    $region56: #{tpu_custom_call.1} parent=1 // pred_region
      %1598 = vsyncadd [#allocation8], 0
      %s1599 = sshll.u32 [#allocation15], 4
      %s1600 = int_to_ptr.vmem [resolvable:$true] %s1599
      %s1601 = sshll.u32 %s8, 4
      %s1602 = int_to_ptr.hbm [resolvable:$true] %s1601
      %1607 = dma.vmem_to_hbm [thread:$0]  %s1600, 256, %s1602, [#allocation8], 32, 32, 2
    $region57: #{tpu_custom_call.1} parent=1 // pred_fallthru
      _
    // Predicated region
    $region58: #{tpu_custom_call.1} parent=1 // pred_check
      _
    $region59: #{tpu_custom_call.1} parent=1 // pred_check_branch
      %1609 = sbr.rel (0) target = $region61
    $region60: #{tpu_custom_call.1} parent=1 // pred_region
      %1611 = vsyncadd [#allocation17], 0
      %s1613 = sshll.u32 [#allocation16], 4
      %s1614 = int_to_ptr.vmem [resolvable:$true] %s1613
      %s1615 = sshll.u32 %s9, 4
      %s1616 = int_to_ptr.hbm [resolvable:$true] %s1615
      %1618 = dma.vmem_to_hbm [thread:$0]  %s1614, 32, %s1616, [#allocation17]
    $region61: #{tpu_custom_call.1} parent=1 // pred_fallthru
      _
    // Predicated region
    $region62: #{tpu_custom_call.1} parent=1 // pred_check
      _
    $region63: #{tpu_custom_call.1} parent=1 // pred_check_branch
      %1620 = sbr.rel (0) target = $region65
    $region64: #{tpu_custom_call.1} parent=1 // pred_region
      %1622 = vsyncadd [#allocation17], 0
      %s1624 = sshll.u32 [#allocation18], 4
      %s1625 = int_to_ptr.vmem [resolvable:$true] %s1624
      %s1626 = sshll.u32 %s10, 4
      %s1627 = int_to_ptr.hbm [resolvable:$true] %s1626
      %1629 = dma.vmem_to_hbm [thread:$0]  %s1625, 32, %s1627, [#allocation17]
    $region65: #{tpu_custom_call.1} parent=1 // pred_fallthru
      _
    // Predicated region
    $region66: #{tpu_custom_call.1} parent=1 // pred_check
      _
    $region67: #{tpu_custom_call.1} parent=1 // pred_check_branch
      %1631 = sbr.rel (0) target = $region69
    $region68: #{tpu_custom_call.1} parent=1 // pred_region
      %1633 = dma.done [#allocation8], 256
    $region69: #{tpu_custom_call.1} parent=1 // pred_fallthru
      _
    // Predicated region
    $region70: #{tpu_custom_call.1} parent=1 // pred_check
      _
    $region71: #{tpu_custom_call.1} parent=1 // pred_check_branch
      %1635 = sbr.rel (0) target = $region73
    $region72: #{tpu_custom_call.1} parent=1 // pred_region
      %1637 = dma.done [#allocation17], 32
    $region73: #{tpu_custom_call.1} parent=1 // pred_fallthru
      _
    // Predicated region
    $region74: #{tpu_custom_call.1} parent=1 // pred_check
      _
    $region75: #{tpu_custom_call.1} parent=1 // pred_check_branch
      %1639 = sbr.rel (0) target = $region77
    $region76: #{tpu_custom_call.1} parent=1 // pred_region
      %1641 = dma.done [#allocation17], 32
    $region77: #{tpu_custom_call.1} parent=1 // pred_fallthru
      _
    %1642 = vsyncpa [#allocation7], 1
    %1643 = vsyncpa [#allocation10], 1
    %1644 = vsyncpa [#allocation13], 1
    %1645 = vsyncpa [#allocation8], 1
    %1646 = vsyncpa [#allocation17], 1

</llo_original>
